<compile_context>
chip_gen: v5e
topology: v5e:2x2
jax: 0.10.0
libtpu: 0.0.40
codegen_flags: <defaults>
</compile_context>

<pallas_src>
import math
import functools

import jax
import jax.numpy as jnp
from jax import lax
from jax.experimental import pallas as pl
from jax.experimental.pallas import tpu as pltpu

_LN_EPS = 1e-5


# ------------------------------ kernel helpers ------------------------------

def _layernorm(x, g, b):
    mu = jnp.mean(x, axis=-1, keepdims=True)
    var = jnp.mean(jnp.square(x - mu), axis=-1, keepdims=True)
    return (x - mu) * lax.rsqrt(var + _LN_EPS) * g + b


def _dot(a_bf16, w_bf16, bias=None):
    """bf16 MXU matmul with f32 accumulation; optional f32 bias add."""
    y = jnp.dot(a_bf16, w_bf16, preferred_element_type=jnp.float32)
    if bias is not None:
        y = y + bias
    return y


# ------------------------------- fused kernel -------------------------------

def _fused_transformer_kernel(x_ref, posb_ref, we_ref, wqkv_ref, wo_ref,
                              w1_ref, w2_ref, lbias_ref, final_ref, wlog_ref,
                              out_ref, *, B, S, dim, heads, dim_head,
                              num_layers, ff_dim, causal):
    f32, bf16 = jnp.float32, jnp.bfloat16
    inner = heads * dim_head

    # token embedding; positional encoding + embedding bias are pre-folded
    # into one (B*S, dim) slab so this is a single matmul + add.
    h = _dot(x_ref[...].astype(bf16), we_ref[...], posb_ref[...])   # (B*S, dim)

    # additive causal mask (0 / -1e30), built once before the layer loop
    if causal:
        row = lax.broadcasted_iota(jnp.int32, (S, S), 0)
        col = lax.broadcasted_iota(jnp.int32, (S, S), 1)
        mask_add = jnp.where(col <= row, jnp.float32(0.0),
                             jnp.float32(-1e30))[None, :, :]        # (1, S, S)

    def split_heads(t):
        # (B*S, inner) f32 -> (heads*B, S, dim_head) f32, merged batch = (h, b)
        return jnp.concatenate(
            [t[:, hh * dim_head:(hh + 1) * dim_head].reshape(B, S, dim_head)
             for hh in range(heads)], axis=0)

    for l in range(num_layers):
        lb = lbias_ref[l]                                   # (10, W) f32
        ln1_g, ln1_b = lb[0:1, :dim], lb[1:2, :dim]
        bq, bk, bv = lb[2:3, :inner], lb[3:4, :inner], lb[4:5, :inner]
        bo = lb[5:6, :dim]
        ln2_g, ln2_b = lb[6:7, :dim], lb[7:8, :dim]
        b1, b2 = lb[8:9, :ff_dim], lb[9:10, :dim]

        # ---------------- attention sublayer (pre-norm) ----------------
        n = _layernorm(h, ln1_g, ln1_b)
        nb = n.astype(bf16)
        # three fat projections from the stacked (L,3,dim,inner) slab; the
        # 1/sqrt(dim_head) scale is already folded into Wq / bq host-side.
        q = _dot(nb, wqkv_ref[l, 0], bq)                    # (B*S, inner) f32
        k = _dot(nb, wqkv_ref[l, 1], bk)
        v = _dot(nb, wqkv_ref[l, 2], bv)

        qn = split_heads(q).astype(bf16)                    # (heads*B, S, dh)
        kn = split_heads(k).astype(bf16)
        vn = split_heads(v).astype(bf16)

        # head-batched scores + ONE softmax over all heads/batches (f32)
        s = jnp.einsum('nqd,nkd->nqk', qn, kn,
                       preferred_element_type=f32)          # (heads*B, S, S)
        if causal:
            s = s + mask_add
        s = s - jnp.max(s, axis=-1, keepdims=True)
        p = jnp.exp(s)
        p = p / jnp.sum(p, axis=-1, keepdims=True)          # exact divide
        o = jnp.einsum('nqk,nkd->nqd', p.astype(bf16), vn,
                       preferred_element_type=f32)          # (heads*B, S, dh)

        # merge heads back to (B*S, inner) and do ONE fused Wo matmul
        o_cat = jnp.concatenate(
            [o[hh * B:(hh + 1) * B].reshape(B * S, dim_head)
             for hh in range(heads)], axis=-1)              # (B*S, inner)
        h = h + _dot(o_cat.astype(bf16), wo_ref[l], bo)

        # ---------------- feed-forward sublayer (pre-norm) ----------------
        n2 = _layernorm(h, ln2_g, ln2_b)
        f = jax.nn.gelu(_dot(n2.astype(bf16), w1_ref[l], b1),
                        approximate=True)                   # f32 EUP tanh
        h = h + _dot(f.astype(bf16), w2_ref[l], b2)

    # ---------------- final LayerNorm + logits (lane-dense store) ----------
    nf = _layernorm(h, final_ref[0:1, :dim], final_ref[1:2, :dim])
    logits = _dot(nf.astype(bf16), wlog_ref[...],
                  final_ref[2:3, :out_ref.shape[-1]])
    out_ref[...] = logits.astype(out_ref.dtype)


# --------------------------- parameters / wrapper ---------------------------

def _round_up(x, m):
    return ((x + m - 1) // m) * m


def _uniform_linear(key, fan_in, fan_out):
    # matches torch.nn.Linear default uniform(-1/sqrt(fan_in), 1/sqrt(fan_in))
    kw, kb = jax.random.split(key)
    bound = 1.0 / math.sqrt(fan_in)
    w = jax.random.uniform(kw, (fan_in, fan_out), jnp.float32, -bound, bound)
    b = jax.random.uniform(kb, (fan_out,), jnp.float32, -bound, bound)
    return w, b


def _sinusoidal_pe(max_len, dim):
    pos = jnp.arange(max_len, dtype=jnp.float32)[:, None]
    i = jnp.arange(dim, dtype=jnp.float32)[None, :]
    angle = pos / jnp.power(10000.0, (2.0 * jnp.floor(i / 2.0)) / dim)
    pe = jnp.where((jnp.arange(dim) % 2) == 0, jnp.sin(angle), jnp.cos(angle))
    return pe.astype(jnp.float32)  # (max_len, dim)


def init_params(key, *, dim, num_unique_tokens, num_layers, heads, dim_head,
                max_seq_len, batch_size, seq_len, ff_mult=4, causal=True):
    inner = heads * dim_head
    ff_dim = ff_mult * dim
    vin = num_unique_tokens + 3
    vin_pad = _round_up(vin, 16)                  # aligned bf16 contraction
    vocab_pad = _round_up(num_unique_tokens, 128)  # lane-dense logits store
    W = _round_up(max(dim, inner, ff_dim), 128)    # width of f32 bias slab
    Wf = _round_up(max(dim, vocab_pad), 128)
    scale = 1.0 / math.sqrt(dim_head)

    keys = jax.random.split(key, 2 + 4 * num_layers)

    # token embedding (input features zero-padded to vin_pad)
    we, be = _uniform_linear(keys[0], vin, dim)
    we_pad = jnp.pad(we, ((0, vin_pad - vin), (0, 0))).astype(jnp.bfloat16)

    # positional encoding + embedding bias folded into one (B*S, dim) slab
    pe = _sinusoidal_pe(max_seq_len, dim)[:seq_len]            # (S, dim)
    pos_bias = jnp.tile(pe + be[None, :], (batch_size, 1))     # (B*S, dim)

    # logits head (vocab zero-padded to a lane-dense width)
    wlog, blog = _uniform_linear(keys[1], dim, num_unique_tokens)
    wlog_pad = jnp.pad(
        wlog, ((0, 0), (0, vocab_pad - num_unique_tokens))).astype(jnp.bfloat16)
    final_slab = jnp.zeros((3, Wf), jnp.float32)
    final_slab = final_slab.at[0, :dim].set(1.0)               # ln_f gamma
    final_slab = final_slab.at[2, :num_unique_tokens].set(blog)

    # per-layer stacked weight slabs (bf16) + one f32 bias/LN slab
    wqkv_s, wo_s, w1_s, w2_s, bias_s = [], [], [], [], []
    for l in range(num_layers):
        k0, k1, k2, k3 = keys[2 + 4 * l: 2 + 4 * (l + 1)]
        wqkv, bqkv = _uniform_linear(k0, dim, 3 * inner)
        wo, bo = _uniform_linear(k1, inner, dim)
        w1, b1 = _uniform_linear(k2, dim, ff_dim)
        w2, b2 = _uniform_linear(k3, ff_dim, dim)
        # fold the 1/sqrt(dim_head) attention scale into Wq / bq
        wq = wqkv[:, :inner] * scale
        wk = wqkv[:, inner:2 * inner]
        wv = wqkv[:, 2 * inner:]
        bq = bqkv[:inner] * scale
        bk = bqkv[inner:2 * inner]
        bv = bqkv[2 * inner:]
        wqkv_s.append(jnp.stack([wq, wk, wv], 0).astype(jnp.bfloat16))
        wo_s.append(wo.astype(jnp.bfloat16))
        w1_s.append(w1.astype(jnp.bfloat16))
        w2_s.append(w2.astype(jnp.bfloat16))
        rows = jnp.zeros((10, W), jnp.float32)
        rows = rows.at[0, :dim].set(1.0)       # ln1 gamma (beta row 1 = 0)
        rows = rows.at[2, :inner].set(bq)
        rows = rows.at[3, :inner].set(bk)
        rows = rows.at[4, :inner].set(bv)
        rows = rows.at[5, :dim].set(bo)
        rows = rows.at[6, :dim].set(1.0)       # ln2 gamma (beta row 7 = 0)
        rows = rows.at[8, :ff_dim].set(b1)
        rows = rows.at[9, :dim].set(b2)
        bias_s.append(rows)

    return dict(
        dim=dim, heads=heads, dim_head=dim_head, num_layers=num_layers,
        causal=causal, vocab=num_unique_tokens, vin=vin, vin_pad=vin_pad,
        vocab_pad=vocab_pad, ff_dim=ff_dim,
        batch_size=batch_size, seq_len=seq_len,
        we=we_pad, pos_bias=pos_bias,
        wqkv=jnp.stack(wqkv_s, 0), wo=jnp.stack(wo_s, 0),
        w1=jnp.stack(w1_s, 0), w2=jnp.stack(w2_s, 0),
        lbias=jnp.stack(bias_s, 0),
        final=final_slab, wlog=wlog_pad,
    )


def simple_transformer_forward(params, x):
    """x: (B, S, vin) or already padded (B, S, vin_pad)."""
    B, S = params["batch_size"], params["seq_len"]
    assert x.shape[0] == B and x.shape[1] == S, (x.shape, B, S)
    vin_pad = params["vin_pad"]

    x2 = x.reshape(B * S, x.shape[-1]).astype(jnp.float32)
    if x2.shape[-1] < vin_pad:
        # callers should pre-pad x where it is produced; this is a fallback
        x2 = jnp.pad(x2, ((0, 0), (0, vin_pad - x2.shape[-1])))

    kernel = functools.partial(
        _fused_transformer_kernel, B=B, S=S, dim=params["dim"],
        heads=params["heads"], dim_head=params["dim_head"],
        num_layers=params["num_layers"], ff_dim=params["ff_dim"],
        causal=params["causal"])

    inputs = [x2, params["pos_bias"], params["we"], params["wqkv"],
              params["wo"], params["w1"], params["w2"], params["lbias"],
              params["final"], params["wlog"]]

    vmem = pl.BlockSpec(memory_space=pltpu.MemorySpace.VMEM)
    out = pl.pallas_call(
        kernel,
        out_shape=jax.ShapeDtypeStruct((B * S, params["vocab_pad"]),
                                       jnp.float32),
        in_specs=[vmem] * len(inputs),
        out_specs=vmem,
    )(*inputs)
    # slice the lane-padded logits back to the real vocab
    return out[:, :params["vocab"]].reshape(B, S, params["vocab"])


# ----------------------------------- main -----------------------------------

if __name__ == "__main__":
    # Small but consistent configuration:
    #   dim=32, num_unique_tokens=16 (=> input feature dim 19), 2 layers,
    #   4 heads x dim_head 8, batch=2, seq=8.
    DIM = 32
    VOCAB = 16
    LAYERS = 2
    HEADS = 4
    DIM_HEAD = DIM // HEADS
    MAX_SEQ = 104          # max_seq_len - 1 per the module
    B, S = 2, 8

    root = jax.random.PRNGKey(0)
    k_param, k_x = jax.random.split(root)

    params = init_params(k_param, dim=DIM, num_unique_tokens=VOCAB,
                         num_layers=LAYERS, heads=HEADS, dim_head=DIM_HEAD,
                         max_seq_len=MAX_SEQ, batch_size=B, seq_len=S,
                         causal=True)

    # produce x already zero-padded to the aligned contraction width
    x = jax.random.normal(k_x, (B, S, VOCAB + 3), dtype=jnp.float32)
    x_pad = jnp.pad(x, ((0, 0), (0, 0), (0, params["vin_pad"] - (VOCAB + 3))))

    logits = simple_transformer_forward(params, x_pad)
    logits = jax.block_until_ready(logits)
    assert logits.shape == (B, S, VOCAB), logits.shape
    assert bool(jnp.all(jnp.isfinite(logits)))
    print("KERNEL_OK")
</pallas_src>

<mosaic_0001>
module attributes {stable_mosaic.version = 11 : i64} {
  func.func @_fused_transformer_kernel(%arg0: memref<16x32xf32, #tpu.memory_space<vmem>>, %arg1: memref<16x32xf32, #tpu.memory_space<vmem>>, %arg2: memref<32x32xbf16, #tpu.memory_space<vmem>>, %arg3: memref<2x3x32x32xbf16, #tpu.memory_space<vmem>>, %arg4: memref<2x32x32xbf16, #tpu.memory_space<vmem>>, %arg5: memref<2x32x128xbf16, #tpu.memory_space<vmem>>, %arg6: memref<2x128x32xbf16, #tpu.memory_space<vmem>>, %arg7: memref<2x10x128xf32, #tpu.memory_space<vmem>>, %arg8: memref<3x128xf32, #tpu.memory_space<vmem>>, %arg9: memref<32x128xbf16, #tpu.memory_space<vmem>>, %arg10: memref<16x128xf32, #tpu.memory_space<vmem>>) attributes {dimension_semantics = [], scalar_prefetch = 0 : i64, scratch_operands = 0 : i64, tpu.core_type = #tpu.core_type<tc>} {
    %c0 = arith.constant 0 : index
    %c0_0 = arith.constant 0 : index
    %0 = vector.load %arg0[%c0, %c0_0] : memref<16x32xf32, #tpu.memory_space<vmem>>, vector<16x32xf32>
    %1 = arith.truncf %0 : vector<16x32xf32> to vector<16x32xbf16>
    %c0_1 = arith.constant 0 : index
    %c0_2 = arith.constant 0 : index
    %2 = vector.load %arg2[%c0_1, %c0_2] : memref<32x32xbf16, #tpu.memory_space<vmem>>, vector<32x32xbf16>
    %c0_3 = arith.constant 0 : index
    %c0_4 = arith.constant 0 : index
    %3 = vector.load %arg1[%c0_3, %c0_4] : memref<16x32xf32, #tpu.memory_space<vmem>>, vector<16x32xf32>
    %cst = arith.constant dense<0.000000e+00> : vector<16x32xf32>
    %4 = tpu.matmul %1, %2, %cst {dimension_numbers = #tpu.dot_dimension_numbers<[1], [0], [0], [1], [0, 0, 1, 1], [], []>} : vector<16x32xbf16>, vector<32x32xbf16>, vector<16x32xf32> -> vector<16x32xf32>
    %5 = arith.addf %4, %3 : vector<16x32xf32>
    %6 = tpu.iota {dimensions = array<i32: 0>} : vector<8x8xi32>
    %7 = tpu.iota {dimensions = array<i32: 1>} : vector<8x8xi32>
    %8 = arith.cmpi sle, %7, %6 : vector<8x8xi32>
    %cst_5 = arith.constant 0.000000e+00 : f32
    %cst_6 = arith.constant -1.000000e+30 : f32
    %9 = vector.broadcast %cst_5 : f32 to vector<8x8xf32>
    %10 = vector.broadcast %cst_6 : f32 to vector<8x8xf32>
    %11 = arith.select %8, %9, %10 : vector<8x8xi1>, vector<8x8xf32>
    %12 = vector.shape_cast %11 : vector<8x8xf32> to vector<1x8x8xf32>
    %c0_7 = arith.constant 0 : index
    %c0_8 = arith.constant 0 : index
    %c0_9 = arith.constant 0 : index
    %13 = vector.load %arg7[%c0_7, %c0_8, %c0_9] : memref<2x10x128xf32, #tpu.memory_space<vmem>>, vector<1x10x128xf32>
    %14 = vector.shape_cast %13 : vector<1x10x128xf32> to vector<10x128xf32>
    %15 = vector.extract_strided_slice %14 {offsets = [0, 0], sizes = [1, 32], strides = [1, 1]} : vector<10x128xf32> to vector<1x32xf32>
    %16 = vector.extract_strided_slice %14 {offsets = [1, 0], sizes = [1, 32], strides = [1, 1]} : vector<10x128xf32> to vector<1x32xf32>
    %17 = vector.extract_strided_slice %14 {offsets = [2, 0], sizes = [1, 32], strides = [1, 1]} : vector<10x128xf32> to vector<1x32xf32>
    %18 = vector.extract_strided_slice %14 {offsets = [3, 0], sizes = [1, 32], strides = [1, 1]} : vector<10x128xf32> to vector<1x32xf32>
    %19 = vector.extract_strided_slice %14 {offsets = [4, 0], sizes = [1, 32], strides = [1, 1]} : vector<10x128xf32> to vector<1x32xf32>
    %20 = vector.extract_strided_slice %14 {offsets = [5, 0], sizes = [1, 32], strides = [1, 1]} : vector<10x128xf32> to vector<1x32xf32>
    %21 = vector.extract_strided_slice %14 {offsets = [6, 0], sizes = [1, 32], strides = [1, 1]} : vector<10x128xf32> to vector<1x32xf32>
    %22 = vector.extract_strided_slice %14 {offsets = [7, 0], sizes = [1, 32], strides = [1, 1]} : vector<10x128xf32> to vector<1x32xf32>
    %23 = vector.extract_strided_slice %14 {offsets = [8, 0], sizes = [1, 128], strides = [1, 1]} : vector<10x128xf32> to vector<1x128xf32>
    %24 = vector.extract_strided_slice %14 {offsets = [9, 0], sizes = [1, 32], strides = [1, 1]} : vector<10x128xf32> to vector<1x32xf32>
    %cst_10 = arith.constant dense<0.000000e+00> : vector<16xf32>
    %25 = vector.multi_reduction <add>, %5, %cst_10 [1] : vector<16x32xf32> to vector<16xf32>
    %26 = vector.shape_cast %25 : vector<16xf32> to vector<16x1xf32>
    %cst_11 = arith.constant 3.200000e+01 : f32
    %27 = vector.broadcast %cst_11 : f32 to vector<16x1xf32>
    %28 = arith.divf %26, %27 : vector<16x1xf32>
    %29 = vector.broadcast %28 : vector<16x1xf32> to vector<16x32xf32>
    %30 = arith.subf %5, %29 : vector<16x32xf32>
    %31 = arith.mulf %30, %30 : vector<16x32xf32>
    %cst_12 = arith.constant dense<0.000000e+00> : vector<16xf32>
    %32 = vector.multi_reduction <add>, %31, %cst_12 [1] : vector<16x32xf32> to vector<16xf32>
    %33 = vector.shape_cast %32 : vector<16xf32> to vector<16x1xf32>
    %cst_13 = arith.constant 3.200000e+01 : f32
    %34 = vector.broadcast %cst_13 : f32 to vector<16x1xf32>
    %35 = arith.divf %33, %34 : vector<16x1xf32>
    %36 = vector.broadcast %28 : vector<16x1xf32> to vector<16x32xf32>
    %37 = arith.subf %5, %36 : vector<16x32xf32>
    %cst_14 = arith.constant 9.99999974E-6 : f32
    %38 = vector.broadcast %cst_14 : f32 to vector<16x1xf32>
    %39 = arith.addf %35, %38 : vector<16x1xf32>
    %40 = math.rsqrt %39 : vector<16x1xf32>
    %41 = vector.broadcast %40 : vector<16x1xf32> to vector<16x32xf32>
    %42 = arith.mulf %37, %41 : vector<16x32xf32>
    %43 = vector.broadcast %15 : vector<1x32xf32> to vector<16x32xf32>
    %44 = arith.mulf %42, %43 : vector<16x32xf32>
    %45 = vector.broadcast %16 : vector<1x32xf32> to vector<16x32xf32>
    %46 = arith.addf %44, %45 : vector<16x32xf32>
    %47 = arith.truncf %46 : vector<16x32xf32> to vector<16x32xbf16>
    %c0_15 = arith.constant 0 : index
    %c0_16 = arith.constant 0 : index
    %c0_17 = arith.constant 0 : index
    %c0_18 = arith.constant 0 : index
    %48 = vector.load %arg3[%c0_15, %c0_16, %c0_17, %c0_18] : memref<2x3x32x32xbf16, #tpu.memory_space<vmem>>, vector<1x1x32x32xbf16>
    %49 = vector.shape_cast %48 : vector<1x1x32x32xbf16> to vector<32x32xbf16>
    %cst_19 = arith.constant dense<0.000000e+00> : vector<16x32xf32>
    %50 = tpu.matmul %47, %49, %cst_19 {dimension_numbers = #tpu.dot_dimension_numbers<[1], [0], [0], [1], [0, 0, 1, 1], [], []>} : vector<16x32xbf16>, vector<32x32xbf16>, vector<16x32xf32> -> vector<16x32xf32>
    %51 = vector.broadcast %17 : vector<1x32xf32> to vector<16x32xf32>
    %52 = arith.addf %50, %51 : vector<16x32xf32>
    %c0_20 = arith.constant 0 : index
    %c1 = arith.constant 1 : index
    %c0_21 = arith.constant 0 : index
    %c0_22 = arith.constant 0 : index
    %53 = vector.load %arg3[%c0_20, %c1, %c0_21, %c0_22] : memref<2x3x32x32xbf16, #tpu.memory_space<vmem>>, vector<1x1x32x32xbf16>
    %54 = vector.shape_cast %53 : vector<1x1x32x32xbf16> to vector<32x32xbf16>
    %cst_23 = arith.constant dense<0.000000e+00> : vector<16x32xf32>
    %55 = tpu.matmul %47, %54, %cst_23 {dimension_numbers = #tpu.dot_dimension_numbers<[1], [0], [0], [1], [0, 0, 1, 1], [], []>} : vector<16x32xbf16>, vector<32x32xbf16>, vector<16x32xf32> -> vector<16x32xf32>
    %56 = vector.broadcast %18 : vector<1x32xf32> to vector<16x32xf32>
    %57 = arith.addf %55, %56 : vector<16x32xf32>
    %c0_24 = arith.constant 0 : index
    %c2 = arith.constant 2 : index
    %c0_25 = arith.constant 0 : index
    %c0_26 = arith.constant 0 : index
    %58 = vector.load %arg3[%c0_24, %c2, %c0_25, %c0_26] : memref<2x3x32x32xbf16, #tpu.memory_space<vmem>>, vector<1x1x32x32xbf16>
    %59 = vector.shape_cast %58 : vector<1x1x32x32xbf16> to vector<32x32xbf16>
    %cst_27 = arith.constant dense<0.000000e+00> : vector<16x32xf32>
    %60 = tpu.matmul %47, %59, %cst_27 {dimension_numbers = #tpu.dot_dimension_numbers<[1], [0], [0], [1], [0, 0, 1, 1], [], []>} : vector<16x32xbf16>, vector<32x32xbf16>, vector<16x32xf32> -> vector<16x32xf32>
    %61 = vector.broadcast %19 : vector<1x32xf32> to vector<16x32xf32>
    %62 = arith.addf %60, %61 : vector<16x32xf32>
    %63 = vector.extract_strided_slice %52 {offsets = [0, 0], sizes = [16, 8], strides = [1, 1]} : vector<16x32xf32> to vector<16x8xf32>
    %64 = vector.shape_cast %63 : vector<16x8xf32> to vector<2x8x8xf32>
    %65 = vector.extract_strided_slice %52 {offsets = [0, 8], sizes = [16, 8], strides = [1, 1]} : vector<16x32xf32> to vector<16x8xf32>
    %66 = vector.shape_cast %65 : vector<16x8xf32> to vector<2x8x8xf32>
    %67 = vector.extract_strided_slice %52 {offsets = [0, 16], sizes = [16, 8], strides = [1, 1]} : vector<16x32xf32> to vector<16x8xf32>
    %68 = vector.shape_cast %67 : vector<16x8xf32> to vector<2x8x8xf32>
    %69 = vector.extract_strided_slice %52 {offsets = [0, 24], sizes = [16, 8], strides = [1, 1]} : vector<16x32xf32> to vector<16x8xf32>
    %70 = vector.shape_cast %69 : vector<16x8xf32> to vector<2x8x8xf32>
    %71 = tpu.concatenate %64, %66, %68, %70 in 0 : vector<2x8x8xf32>, vector<2x8x8xf32>, vector<2x8x8xf32>, vector<2x8x8xf32> -> vector<8x8x8xf32>
    %72 = arith.truncf %71 : vector<8x8x8xf32> to vector<8x8x8xbf16>
    %73 = vector.extract_strided_slice %57 {offsets = [0, 0], sizes = [16, 8], strides = [1, 1]} : vector<16x32xf32> to vector<16x8xf32>
    %74 = vector.shape_cast %73 : vector<16x8xf32> to vector<2x8x8xf32>
    %75 = vector.extract_strided_slice %57 {offsets = [0, 8], sizes = [16, 8], strides = [1, 1]} : vector<16x32xf32> to vector<16x8xf32>
    %76 = vector.shape_cast %75 : vector<16x8xf32> to vector<2x8x8xf32>
    %77 = vector.extract_strided_slice %57 {offsets = [0, 16], sizes = [16, 8], strides = [1, 1]} : vector<16x32xf32> to vector<16x8xf32>
    %78 = vector.shape_cast %77 : vector<16x8xf32> to vector<2x8x8xf32>
    %79 = vector.extract_strided_slice %57 {offsets = [0, 24], sizes = [16, 8], strides = [1, 1]} : vector<16x32xf32> to vector<16x8xf32>
    %80 = vector.shape_cast %79 : vector<16x8xf32> to vector<2x8x8xf32>
    %81 = tpu.concatenate %74, %76, %78, %80 in 0 : vector<2x8x8xf32>, vector<2x8x8xf32>, vector<2x8x8xf32>, vector<2x8x8xf32> -> vector<8x8x8xf32>
    %82 = arith.truncf %81 : vector<8x8x8xf32> to vector<8x8x8xbf16>
    %83 = vector.extract_strided_slice %62 {offsets = [0, 0], sizes = [16, 8], strides = [1, 1]} : vector<16x32xf32> to vector<16x8xf32>
    %84 = vector.shape_cast %83 : vector<16x8xf32> to vector<2x8x8xf32>
    %85 = vector.extract_strided_slice %62 {offsets = [0, 8], sizes = [16, 8], strides = [1, 1]} : vector<16x32xf32> to vector<16x8xf32>
    %86 = vector.shape_cast %85 : vector<16x8xf32> to vector<2x8x8xf32>
    %87 = vector.extract_strided_slice %62 {offsets = [0, 16], sizes = [16, 8], strides = [1, 1]} : vector<16x32xf32> to vector<16x8xf32>
    %88 = vector.shape_cast %87 : vector<16x8xf32> to vector<2x8x8xf32>
    %89 = vector.extract_strided_slice %62 {offsets = [0, 24], sizes = [16, 8], strides = [1, 1]} : vector<16x32xf32> to vector<16x8xf32>
    %90 = vector.shape_cast %89 : vector<16x8xf32> to vector<2x8x8xf32>
    %91 = tpu.concatenate %84, %86, %88, %90 in 0 : vector<2x8x8xf32>, vector<2x8x8xf32>, vector<2x8x8xf32>, vector<2x8x8xf32> -> vector<8x8x8xf32>
    %92 = arith.truncf %91 : vector<8x8x8xf32> to vector<8x8x8xbf16>
    "tpu.trace_start"() <{level = 10 : i32, message = "nqd,nkd->nqk"}> : () -> ()
    %cst_28 = arith.constant dense<0.000000e+00> : vector<8x8x8xf32>
    %93 = tpu.matmul %72, %82, %cst_28 {dimension_numbers = #tpu.dot_dimension_numbers<[2], [2], [1], [1], [0, 0, 0, 1, 1, 1], [0], [0]>} : vector<8x8x8xbf16>, vector<8x8x8xbf16>, vector<8x8x8xf32> -> vector<8x8x8xf32>
    "tpu.trace_stop"() : () -> ()
    %94 = vector.broadcast %12 : vector<1x8x8xf32> to vector<8x8x8xf32>
    %95 = arith.addf %93, %94 : vector<8x8x8xf32>
    %cst_29 = arith.constant dense<0xFF800000> : vector<8x8xf32>
    %96 = vector.multi_reduction <maximumf>, %95, %cst_29 [2] : vector<8x8x8xf32> to vector<8x8xf32>
    %97 = vector.shape_cast %96 : vector<8x8xf32> to vector<8x8x1xf32>
    %98 = vector.broadcast %97 : vector<8x8x1xf32> to vector<8x8x8xf32>
    %99 = arith.subf %95, %98 : vector<8x8x8xf32>
    %100 = math.exp %99 : vector<8x8x8xf32>
    %cst_30 = arith.constant dense<0.000000e+00> : vector<8x8xf32>
    %101 = vector.multi_reduction <add>, %100, %cst_30 [2] : vector<8x8x8xf32> to vector<8x8xf32>
    %102 = vector.shape_cast %101 : vector<8x8xf32> to vector<8x8x1xf32>
    %103 = vector.broadcast %102 : vector<8x8x1xf32> to vector<8x8x8xf32>
    %104 = arith.divf %100, %103 : vector<8x8x8xf32>
    %105 = arith.truncf %104 : vector<8x8x8xf32> to vector<8x8x8xbf16>
    "tpu.trace_start"() <{level = 10 : i32, message = "nqk,nkd->nqd"}> : () -> ()
    %cst_31 = arith.constant dense<0.000000e+00> : vector<8x8x8xf32>
    %106 = tpu.matmul %105, %92, %cst_31 {dimension_numbers = #tpu.dot_dimension_numbers<[2], [1], [1], [2], [0, 0, 0, 1, 1, 2], [0], [0]>} : vector<8x8x8xbf16>, vector<8x8x8xbf16>, vector<8x8x8xf32> -> vector<8x8x8xf32>
    "tpu.trace_stop"() : () -> ()
    %107 = vector.extract_strided_slice %106 {offsets = [0, 0, 0], sizes = [2, 8, 8], strides = [1, 1, 1]} : vector<8x8x8xf32> to vector<2x8x8xf32>
    %108 = vector.shape_cast %107 : vector<2x8x8xf32> to vector<16x8xf32>
    %109 = vector.extract_strided_slice %106 {offsets = [2, 0, 0], sizes = [2, 8, 8], strides = [1, 1, 1]} : vector<8x8x8xf32> to vector<2x8x8xf32>
    %110 = vector.shape_cast %109 : vector<2x8x8xf32> to vector<16x8xf32>
    %111 = vector.extract_strided_slice %106 {offsets = [4, 0, 0], sizes = [2, 8, 8], strides = [1, 1, 1]} : vector<8x8x8xf32> to vector<2x8x8xf32>
    %112 = vector.shape_cast %111 : vector<2x8x8xf32> to vector<16x8xf32>
    %113 = vector.extract_strided_slice %106 {offsets = [6, 0, 0], sizes = [2, 8, 8], strides = [1, 1, 1]} : vector<8x8x8xf32> to vector<2x8x8xf32>
    %114 = vector.shape_cast %113 : vector<2x8x8xf32> to vector<16x8xf32>
    %115 = tpu.concatenate %108, %110, %112, %114 in 1 : vector<16x8xf32>, vector<16x8xf32>, vector<16x8xf32>, vector<16x8xf32> -> vector<16x32xf32>
    %116 = arith.truncf %115 : vector<16x32xf32> to vector<16x32xbf16>
    %c0_32 = arith.constant 0 : index
    %c0_33 = arith.constant 0 : index
    %c0_34 = arith.constant 0 : index
    %117 = vector.load %arg4[%c0_32, %c0_33, %c0_34] : memref<2x32x32xbf16, #tpu.memory_space<vmem>>, vector<1x32x32xbf16>
    %118 = vector.shape_cast %117 : vector<1x32x32xbf16> to vector<32x32xbf16>
    %cst_35 = arith.constant dense<0.000000e+00> : vector<16x32xf32>
    %119 = tpu.matmul %116, %118, %cst_35 {dimension_numbers = #tpu.dot_dimension_numbers<[1], [0], [0], [1], [0, 0, 1, 1], [], []>} : vector<16x32xbf16>, vector<32x32xbf16>, vector<16x32xf32> -> vector<16x32xf32>
    %120 = vector.broadcast %20 : vector<1x32xf32> to vector<16x32xf32>
    %121 = arith.addf %119, %120 : vector<16x32xf32>
    %122 = arith.addf %5, %121 : vector<16x32xf32>
    %cst_36 = arith.constant dense<0.000000e+00> : vector<16xf32>
    %123 = vector.multi_reduction <add>, %122, %cst_36 [1] : vector<16x32xf32> to vector<16xf32>
    %124 = vector.shape_cast %123 : vector<16xf32> to vector<16x1xf32>
    %cst_37 = arith.constant 3.200000e+01 : f32
    %125 = vector.broadcast %cst_37 : f32 to vector<16x1xf32>
    %126 = arith.divf %124, %125 : vector<16x1xf32>
    %127 = vector.broadcast %126 : vector<16x1xf32> to vector<16x32xf32>
    %128 = arith.subf %122, %127 : vector<16x32xf32>
    %129 = arith.mulf %128, %128 : vector<16x32xf32>
    %cst_38 = arith.constant dense<0.000000e+00> : vector<16xf32>
    %130 = vector.multi_reduction <add>, %129, %cst_38 [1] : vector<16x32xf32> to vector<16xf32>
    %131 = vector.shape_cast %130 : vector<16xf32> to vector<16x1xf32>
    %cst_39 = arith.constant 3.200000e+01 : f32
    %132 = vector.broadcast %cst_39 : f32 to vector<16x1xf32>
    %133 = arith.divf %131, %132 : vector<16x1xf32>
    %134 = vector.broadcast %126 : vector<16x1xf32> to vector<16x32xf32>
    %135 = arith.subf %122, %134 : vector<16x32xf32>
    %cst_40 = arith.constant 9.99999974E-6 : f32
    %136 = vector.broadcast %cst_40 : f32 to vector<16x1xf32>
    %137 = arith.addf %133, %136 : vector<16x1xf32>
    %138 = math.rsqrt %137 : vector<16x1xf32>
    %139 = vector.broadcast %138 : vector<16x1xf32> to vector<16x32xf32>
    %140 = arith.mulf %135, %139 : vector<16x32xf32>
    %141 = vector.broadcast %21 : vector<1x32xf32> to vector<16x32xf32>
    %142 = arith.mulf %140, %141 : vector<16x32xf32>
    %143 = vector.broadcast %22 : vector<1x32xf32> to vector<16x32xf32>
    %144 = arith.addf %142, %143 : vector<16x32xf32>
    %145 = arith.truncf %144 : vector<16x32xf32> to vector<16x32xbf16>
    %c0_41 = arith.constant 0 : index
    %c0_42 = arith.constant 0 : index
    %c0_43 = arith.constant 0 : index
    %146 = vector.load %arg5[%c0_41, %c0_42, %c0_43] : memref<2x32x128xbf16, #tpu.memory_space<vmem>>, vector<1x32x128xbf16>
    %147 = vector.shape_cast %146 : vector<1x32x128xbf16> to vector<32x128xbf16>
    %cst_44 = arith.constant dense<0.000000e+00> : vector<16x128xf32>
    %148 = tpu.matmul %145, %147, %cst_44 {dimension_numbers = #tpu.dot_dimension_numbers<[1], [0], [0], [1], [0, 0, 1, 1], [], []>} : vector<16x32xbf16>, vector<32x128xbf16>, vector<16x128xf32> -> vector<16x128xf32>
    %149 = vector.broadcast %23 : vector<1x128xf32> to vector<16x128xf32>
    %150 = arith.addf %148, %149 : vector<16x128xf32>
    %151 = arith.mulf %150, %150 : vector<16x128xf32>
    %152 = arith.mulf %150, %151 : vector<16x128xf32>
    %cst_45 = arith.constant 4.471500e-02 : f32
    %153 = vector.broadcast %cst_45 : f32 to vector<16x128xf32>
    %154 = arith.mulf %153, %152 : vector<16x128xf32>
    %155 = arith.addf %150, %154 : vector<16x128xf32>
    %cst_46 = arith.constant 0.797884583 : f32
    %156 = vector.broadcast %cst_46 : f32 to vector<16x128xf32>
    %157 = arith.mulf %156, %155 : vector<16x128xf32>
    %158 = math.tanh %157 : vector<16x128xf32>
    %cst_47 = arith.constant 1.000000e+00 : f32
    %159 = vector.broadcast %cst_47 : f32 to vector<16x128xf32>
    %160 = arith.addf %159, %158 : vector<16x128xf32>
    %cst_48 = arith.constant 5.000000e-01 : f32
    %161 = vector.broadcast %cst_48 : f32 to vector<16x128xf32>
    %162 = arith.mulf %161, %160 : vector<16x128xf32>
    %163 = arith.mulf %150, %162 : vector<16x128xf32>
    %164 = arith.truncf %163 : vector<16x128xf32> to vector<16x128xbf16>
    %c0_49 = arith.constant 0 : index
    %c0_50 = arith.constant 0 : index
    %c0_51 = arith.constant 0 : index
    %165 = vector.load %arg6[%c0_49, %c0_50, %c0_51] : memref<2x128x32xbf16, #tpu.memory_space<vmem>>, vector<1x128x32xbf16>
    %166 = vector.shape_cast %165 : vector<1x128x32xbf16> to vector<128x32xbf16>
    %cst_52 = arith.constant dense<0.000000e+00> : vector<16x32xf32>
    %167 = tpu.matmul %164, %166, %cst_52 {dimension_numbers = #tpu.dot_dimension_numbers<[1], [0], [0], [1], [0, 0, 1, 1], [], []>} : vector<16x128xbf16>, vector<128x32xbf16>, vector<16x32xf32> -> vector<16x32xf32>
    %168 = vector.broadcast %24 : vector<1x32xf32> to vector<16x32xf32>
    %169 = arith.addf %167, %168 : vector<16x32xf32>
    %170 = arith.addf %122, %169 : vector<16x32xf32>
    %c1_53 = arith.constant 1 : index
    %c0_54 = arith.constant 0 : index
    %c0_55 = arith.constant 0 : index
    %171 = vector.load %arg7[%c1_53, %c0_54, %c0_55] : memref<2x10x128xf32, #tpu.memory_space<vmem>>, vector<1x10x128xf32>
    %172 = vector.shape_cast %171 : vector<1x10x128xf32> to vector<10x128xf32>
    %173 = vector.extract_strided_slice %172 {offsets = [0, 0], sizes = [1, 32], strides = [1, 1]} : vector<10x128xf32> to vector<1x32xf32>
    %174 = vector.extract_strided_slice %172 {offsets = [1, 0], sizes = [1, 32], strides = [1, 1]} : vector<10x128xf32> to vector<1x32xf32>
    %175 = vector.extract_strided_slice %172 {offsets = [2, 0], sizes = [1, 32], strides = [1, 1]} : vector<10x128xf32> to vector<1x32xf32>
    %176 = vector.extract_strided_slice %172 {offsets = [3, 0], sizes = [1, 32], strides = [1, 1]} : vector<10x128xf32> to vector<1x32xf32>
    %177 = vector.extract_strided_slice %172 {offsets = [4, 0], sizes = [1, 32], strides = [1, 1]} : vector<10x128xf32> to vector<1x32xf32>
    %178 = vector.extract_strided_slice %172 {offsets = [5, 0], sizes = [1, 32], strides = [1, 1]} : vector<10x128xf32> to vector<1x32xf32>
    %179 = vector.extract_strided_slice %172 {offsets = [6, 0], sizes = [1, 32], strides = [1, 1]} : vector<10x128xf32> to vector<1x32xf32>
    %180 = vector.extract_strided_slice %172 {offsets = [7, 0], sizes = [1, 32], strides = [1, 1]} : vector<10x128xf32> to vector<1x32xf32>
    %181 = vector.extract_strided_slice %172 {offsets = [8, 0], sizes = [1, 128], strides = [1, 1]} : vector<10x128xf32> to vector<1x128xf32>
    %182 = vector.extract_strided_slice %172 {offsets = [9, 0], sizes = [1, 32], strides = [1, 1]} : vector<10x128xf32> to vector<1x32xf32>
    %cst_56 = arith.constant dense<0.000000e+00> : vector<16xf32>
    %183 = vector.multi_reduction <add>, %170, %cst_56 [1] : vector<16x32xf32> to vector<16xf32>
    %184 = vector.shape_cast %183 : vector<16xf32> to vector<16x1xf32>
    %cst_57 = arith.constant 3.200000e+01 : f32
    %185 = vector.broadcast %cst_57 : f32 to vector<16x1xf32>
    %186 = arith.divf %184, %185 : vector<16x1xf32>
    %187 = vector.broadcast %186 : vector<16x1xf32> to vector<16x32xf32>
    %188 = arith.subf %170, %187 : vector<16x32xf32>
    %189 = arith.mulf %188, %188 : vector<16x32xf32>
    %cst_58 = arith.constant dense<0.000000e+00> : vector<16xf32>
    %190 = vector.multi_reduction <add>, %189, %cst_58 [1] : vector<16x32xf32> to vector<16xf32>
    %191 = vector.shape_cast %190 : vector<16xf32> to vector<16x1xf32>
    %cst_59 = arith.constant 3.200000e+01 : f32
    %192 = vector.broadcast %cst_59 : f32 to vector<16x1xf32>
    %193 = arith.divf %191, %192 : vector<16x1xf32>
    %194 = vector.broadcast %186 : vector<16x1xf32> to vector<16x32xf32>
    %195 = arith.subf %170, %194 : vector<16x32xf32>
    %cst_60 = arith.constant 9.99999974E-6 : f32
    %196 = vector.broadcast %cst_60 : f32 to vector<16x1xf32>
    %197 = arith.addf %193, %196 : vector<16x1xf32>
    %198 = math.rsqrt %197 : vector<16x1xf32>
    %199 = vector.broadcast %198 : vector<16x1xf32> to vector<16x32xf32>
    %200 = arith.mulf %195, %199 : vector<16x32xf32>
    %201 = vector.broadcast %173 : vector<1x32xf32> to vector<16x32xf32>
    %202 = arith.mulf %200, %201 : vector<16x32xf32>
    %203 = vector.broadcast %174 : vector<1x32xf32> to vector<16x32xf32>
    %204 = arith.addf %202, %203 : vector<16x32xf32>
    %205 = arith.truncf %204 : vector<16x32xf32> to vector<16x32xbf16>
    %c1_61 = arith.constant 1 : index
    %c0_62 = arith.constant 0 : index
    %c0_63 = arith.constant 0 : index
    %c0_64 = arith.constant 0 : index
    %206 = vector.load %arg3[%c1_61, %c0_62, %c0_63, %c0_64] : memref<2x3x32x32xbf16, #tpu.memory_space<vmem>>, vector<1x1x32x32xbf16>
    %207 = vector.shape_cast %206 : vector<1x1x32x32xbf16> to vector<32x32xbf16>
    %cst_65 = arith.constant dense<0.000000e+00> : vector<16x32xf32>
    %208 = tpu.matmul %205, %207, %cst_65 {dimension_numbers = #tpu.dot_dimension_numbers<[1], [0], [0], [1], [0, 0, 1, 1], [], []>} : vector<16x32xbf16>, vector<32x32xbf16>, vector<16x32xf32> -> vector<16x32xf32>
    %209 = vector.broadcast %175 : vector<1x32xf32> to vector<16x32xf32>
    %210 = arith.addf %208, %209 : vector<16x32xf32>
    %c1_66 = arith.constant 1 : index
    %c1_67 = arith.constant 1 : index
    %c0_68 = arith.constant 0 : index
    %c0_69 = arith.constant 0 : index
    %211 = vector.load %arg3[%c1_66, %c1_67, %c0_68, %c0_69] : memref<2x3x32x32xbf16, #tpu.memory_space<vmem>>, vector<1x1x32x32xbf16>
    %212 = vector.shape_cast %211 : vector<1x1x32x32xbf16> to vector<32x32xbf16>
    %cst_70 = arith.constant dense<0.000000e+00> : vector<16x32xf32>
    %213 = tpu.matmul %205, %212, %cst_70 {dimension_numbers = #tpu.dot_dimension_numbers<[1], [0], [0], [1], [0, 0, 1, 1], [], []>} : vector<16x32xbf16>, vector<32x32xbf16>, vector<16x32xf32> -> vector<16x32xf32>
    %214 = vector.broadcast %176 : vector<1x32xf32> to vector<16x32xf32>
    %215 = arith.addf %213, %214 : vector<16x32xf32>
    %c1_71 = arith.constant 1 : index
    %c2_72 = arith.constant 2 : index
    %c0_73 = arith.constant 0 : index
    %c0_74 = arith.constant 0 : index
    %216 = vector.load %arg3[%c1_71, %c2_72, %c0_73, %c0_74] : memref<2x3x32x32xbf16, #tpu.memory_space<vmem>>, vector<1x1x32x32xbf16>
    %217 = vector.shape_cast %216 : vector<1x1x32x32xbf16> to vector<32x32xbf16>
    %cst_75 = arith.constant dense<0.000000e+00> : vector<16x32xf32>
    %218 = tpu.matmul %205, %217, %cst_75 {dimension_numbers = #tpu.dot_dimension_numbers<[1], [0], [0], [1], [0, 0, 1, 1], [], []>} : vector<16x32xbf16>, vector<32x32xbf16>, vector<16x32xf32> -> vector<16x32xf32>
    %219 = vector.broadcast %177 : vector<1x32xf32> to vector<16x32xf32>
    %220 = arith.addf %218, %219 : vector<16x32xf32>
    %221 = vector.extract_strided_slice %210 {offsets = [0, 0], sizes = [16, 8], strides = [1, 1]} : vector<16x32xf32> to vector<16x8xf32>
    %222 = vector.shape_cast %221 : vector<16x8xf32> to vector<2x8x8xf32>
    %223 = vector.extract_strided_slice %210 {offsets = [0, 8], sizes = [16, 8], strides = [1, 1]} : vector<16x32xf32> to vector<16x8xf32>
    %224 = vector.shape_cast %223 : vector<16x8xf32> to vector<2x8x8xf32>
    %225 = vector.extract_strided_slice %210 {offsets = [0, 16], sizes = [16, 8], strides = [1, 1]} : vector<16x32xf32> to vector<16x8xf32>
    %226 = vector.shape_cast %225 : vector<16x8xf32> to vector<2x8x8xf32>
    %227 = vector.extract_strided_slice %210 {offsets = [0, 24], sizes = [16, 8], strides = [1, 1]} : vector<16x32xf32> to vector<16x8xf32>
    %228 = vector.shape_cast %227 : vector<16x8xf32> to vector<2x8x8xf32>
    %229 = tpu.concatenate %222, %224, %226, %228 in 0 : vector<2x8x8xf32>, vector<2x8x8xf32>, vector<2x8x8xf32>, vector<2x8x8xf32> -> vector<8x8x8xf32>
    %230 = arith.truncf %229 : vector<8x8x8xf32> to vector<8x8x8xbf16>
    %231 = vector.extract_strided_slice %215 {offsets = [0, 0], sizes = [16, 8], strides = [1, 1]} : vector<16x32xf32> to vector<16x8xf32>
    %232 = vector.shape_cast %231 : vector<16x8xf32> to vector<2x8x8xf32>
    %233 = vector.extract_strided_slice %215 {offsets = [0, 8], sizes = [16, 8], strides = [1, 1]} : vector<16x32xf32> to vector<16x8xf32>
    %234 = vector.shape_cast %233 : vector<16x8xf32> to vector<2x8x8xf32>
    %235 = vector.extract_strided_slice %215 {offsets = [0, 16], sizes = [16, 8], strides = [1, 1]} : vector<16x32xf32> to vector<16x8xf32>
    %236 = vector.shape_cast %235 : vector<16x8xf32> to vector<2x8x8xf32>
    %237 = vector.extract_strided_slice %215 {offsets = [0, 24], sizes = [16, 8], strides = [1, 1]} : vector<16x32xf32> to vector<16x8xf32>
    %238 = vector.shape_cast %237 : vector<16x8xf32> to vector<2x8x8xf32>
    %239 = tpu.concatenate %232, %234, %236, %238 in 0 : vector<2x8x8xf32>, vector<2x8x8xf32>, vector<2x8x8xf32>, vector<2x8x8xf32> -> vector<8x8x8xf32>
    %240 = arith.truncf %239 : vector<8x8x8xf32> to vector<8x8x8xbf16>
    %241 = vector.extract_strided_slice %220 {offsets = [0, 0], sizes = [16, 8], strides = [1, 1]} : vector<16x32xf32> to vector<16x8xf32>
    %242 = vector.shape_cast %241 : vector<16x8xf32> to vector<2x8x8xf32>
    %243 = vector.extract_strided_slice %220 {offsets = [0, 8], sizes = [16, 8], strides = [1, 1]} : vector<16x32xf32> to vector<16x8xf32>
    %244 = vector.shape_cast %243 : vector<16x8xf32> to vector<2x8x8xf32>
    %245 = vector.extract_strided_slice %220 {offsets = [0, 16], sizes = [16, 8], strides = [1, 1]} : vector<16x32xf32> to vector<16x8xf32>
    %246 = vector.shape_cast %245 : vector<16x8xf32> to vector<2x8x8xf32>
    %247 = vector.extract_strided_slice %220 {offsets = [0, 24], sizes = [16, 8], strides = [1, 1]} : vector<16x32xf32> to vector<16x8xf32>
    %248 = vector.shape_cast %247 : vector<16x8xf32> to vector<2x8x8xf32>
    %249 = tpu.concatenate %242, %244, %246, %248 in 0 : vector<2x8x8xf32>, vector<2x8x8xf32>, vector<2x8x8xf32>, vector<2x8x8xf32> -> vector<8x8x8xf32>
    %250 = arith.truncf %249 : vector<8x8x8xf32> to vector<8x8x8xbf16>
    "tpu.trace_start"() <{level = 10 : i32, message = "nqd,nkd->nqk"}> : () -> ()
    %cst_76 = arith.constant dense<0.000000e+00> : vector<8x8x8xf32>
    %251 = tpu.matmul %230, %240, %cst_76 {dimension_numbers = #tpu.dot_dimension_numbers<[2], [2], [1], [1], [0, 0, 0, 1, 1, 1], [0], [0]>} : vector<8x8x8xbf16>, vector<8x8x8xbf16>, vector<8x8x8xf32> -> vector<8x8x8xf32>
    "tpu.trace_stop"() : () -> ()
    %252 = vector.broadcast %12 : vector<1x8x8xf32> to vector<8x8x8xf32>
    %253 = arith.addf %251, %252 : vector<8x8x8xf32>
    %cst_77 = arith.constant dense<0xFF800000> : vector<8x8xf32>
    %254 = vector.multi_reduction <maximumf>, %253, %cst_77 [2] : vector<8x8x8xf32> to vector<8x8xf32>
    %255 = vector.shape_cast %254 : vector<8x8xf32> to vector<8x8x1xf32>
    %256 = vector.broadcast %255 : vector<8x8x1xf32> to vector<8x8x8xf32>
    %257 = arith.subf %253, %256 : vector<8x8x8xf32>
    %258 = math.exp %257 : vector<8x8x8xf32>
    %cst_78 = arith.constant dense<0.000000e+00> : vector<8x8xf32>
    %259 = vector.multi_reduction <add>, %258, %cst_78 [2] : vector<8x8x8xf32> to vector<8x8xf32>
    %260 = vector.shape_cast %259 : vector<8x8xf32> to vector<8x8x1xf32>
    %261 = vector.broadcast %260 : vector<8x8x1xf32> to vector<8x8x8xf32>
    %262 = arith.divf %258, %261 : vector<8x8x8xf32>
    %263 = arith.truncf %262 : vector<8x8x8xf32> to vector<8x8x8xbf16>
    "tpu.trace_start"() <{level = 10 : i32, message = "nqk,nkd->nqd"}> : () -> ()
    %cst_79 = arith.constant dense<0.000000e+00> : vector<8x8x8xf32>
    %264 = tpu.matmul %263, %250, %cst_79 {dimension_numbers = #tpu.dot_dimension_numbers<[2], [1], [1], [2], [0, 0, 0, 1, 1, 2], [0], [0]>} : vector<8x8x8xbf16>, vector<8x8x8xbf16>, vector<8x8x8xf32> -> vector<8x8x8xf32>
    "tpu.trace_stop"() : () -> ()
    %265 = vector.extract_strided_slice %264 {offsets = [0, 0, 0], sizes = [2, 8, 8], strides = [1, 1, 1]} : vector<8x8x8xf32> to vector<2x8x8xf32>
    %266 = vector.shape_cast %265 : vector<2x8x8xf32> to vector<16x8xf32>
    %267 = vector.extract_strided_slice %264 {offsets = [2, 0, 0], sizes = [2, 8, 8], strides = [1, 1, 1]} : vector<8x8x8xf32> to vector<2x8x8xf32>
    %268 = vector.shape_cast %267 : vector<2x8x8xf32> to vector<16x8xf32>
    %269 = vector.extract_strided_slice %264 {offsets = [4, 0, 0], sizes = [2, 8, 8], strides = [1, 1, 1]} : vector<8x8x8xf32> to vector<2x8x8xf32>
    %270 = vector.shape_cast %269 : vector<2x8x8xf32> to vector<16x8xf32>
    %271 = vector.extract_strided_slice %264 {offsets = [6, 0, 0], sizes = [2, 8, 8], strides = [1, 1, 1]} : vector<8x8x8xf32> to vector<2x8x8xf32>
    %272 = vector.shape_cast %271 : vector<2x8x8xf32> to vector<16x8xf32>
    %273 = tpu.concatenate %266, %268, %270, %272 in 1 : vector<16x8xf32>, vector<16x8xf32>, vector<16x8xf32>, vector<16x8xf32> -> vector<16x32xf32>
    %274 = arith.truncf %273 : vector<16x32xf32> to vector<16x32xbf16>
    %c1_80 = arith.constant 1 : index
    %c0_81 = arith.constant 0 : index
    %c0_82 = arith.constant 0 : index
    %275 = vector.load %arg4[%c1_80, %c0_81, %c0_82] : memref<2x32x32xbf16, #tpu.memory_space<vmem>>, vector<1x32x32xbf16>
    %276 = vector.shape_cast %275 : vector<1x32x32xbf16> to vector<32x32xbf16>
    %cst_83 = arith.constant dense<0.000000e+00> : vector<16x32xf32>
    %277 = tpu.matmul %274, %276, %cst_83 {dimension_numbers = #tpu.dot_dimension_numbers<[1], [0], [0], [1], [0, 0, 1, 1], [], []>} : vector<16x32xbf16>, vector<32x32xbf16>, vector<16x32xf32> -> vector<16x32xf32>
    %278 = vector.broadcast %178 : vector<1x32xf32> to vector<16x32xf32>
    %279 = arith.addf %277, %278 : vector<16x32xf32>
    %280 = arith.addf %170, %279 : vector<16x32xf32>
    %cst_84 = arith.constant dense<0.000000e+00> : vector<16xf32>
    %281 = vector.multi_reduction <add>, %280, %cst_84 [1] : vector<16x32xf32> to vector<16xf32>
    %282 = vector.shape_cast %281 : vector<16xf32> to vector<16x1xf32>
    %cst_85 = arith.constant 3.200000e+01 : f32
    %283 = vector.broadcast %cst_85 : f32 to vector<16x1xf32>
    %284 = arith.divf %282, %283 : vector<16x1xf32>
    %285 = vector.broadcast %284 : vector<16x1xf32> to vector<16x32xf32>
    %286 = arith.subf %280, %285 : vector<16x32xf32>
    %287 = arith.mulf %286, %286 : vector<16x32xf32>
    %cst_86 = arith.constant dense<0.000000e+00> : vector<16xf32>
    %288 = vector.multi_reduction <add>, %287, %cst_86 [1] : vector<16x32xf32> to vector<16xf32>
    %289 = vector.shape_cast %288 : vector<16xf32> to vector<16x1xf32>
    %cst_87 = arith.constant 3.200000e+01 : f32
    %290 = vector.broadcast %cst_87 : f32 to vector<16x1xf32>
    %291 = arith.divf %289, %290 : vector<16x1xf32>
    %292 = vector.broadcast %284 : vector<16x1xf32> to vector<16x32xf32>
    %293 = arith.subf %280, %292 : vector<16x32xf32>
    %cst_88 = arith.constant 9.99999974E-6 : f32
    %294 = vector.broadcast %cst_88 : f32 to vector<16x1xf32>
    %295 = arith.addf %291, %294 : vector<16x1xf32>
    %296 = math.rsqrt %295 : vector<16x1xf32>
    %297 = vector.broadcast %296 : vector<16x1xf32> to vector<16x32xf32>
    %298 = arith.mulf %293, %297 : vector<16x32xf32>
    %299 = vector.broadcast %179 : vector<1x32xf32> to vector<16x32xf32>
    %300 = arith.mulf %298, %299 : vector<16x32xf32>
    %301 = vector.broadcast %180 : vector<1x32xf32> to vector<16x32xf32>
    %302 = arith.addf %300, %301 : vector<16x32xf32>
    %303 = arith.truncf %302 : vector<16x32xf32> to vector<16x32xbf16>
    %c1_89 = arith.constant 1 : index
    %c0_90 = arith.constant 0 : index
    %c0_91 = arith.constant 0 : index
    %304 = vector.load %arg5[%c1_89, %c0_90, %c0_91] : memref<2x32x128xbf16, #tpu.memory_space<vmem>>, vector<1x32x128xbf16>
    %305 = vector.shape_cast %304 : vector<1x32x128xbf16> to vector<32x128xbf16>
    %cst_92 = arith.constant dense<0.000000e+00> : vector<16x128xf32>
    %306 = tpu.matmul %303, %305, %cst_92 {dimension_numbers = #tpu.dot_dimension_numbers<[1], [0], [0], [1], [0, 0, 1, 1], [], []>} : vector<16x32xbf16>, vector<32x128xbf16>, vector<16x128xf32> -> vector<16x128xf32>
    %307 = vector.broadcast %181 : vector<1x128xf32> to vector<16x128xf32>
    %308 = arith.addf %306, %307 : vector<16x128xf32>
    %309 = arith.mulf %308, %308 : vector<16x128xf32>
    %310 = arith.mulf %308, %309 : vector<16x128xf32>
    %cst_93 = arith.constant 4.471500e-02 : f32
    %311 = vector.broadcast %cst_93 : f32 to vector<16x128xf32>
    %312 = arith.mulf %311, %310 : vector<16x128xf32>
    %313 = arith.addf %308, %312 : vector<16x128xf32>
    %cst_94 = arith.constant 0.797884583 : f32
    %314 = vector.broadcast %cst_94 : f32 to vector<16x128xf32>
    %315 = arith.mulf %314, %313 : vector<16x128xf32>
    %316 = math.tanh %315 : vector<16x128xf32>
    %cst_95 = arith.constant 1.000000e+00 : f32
    %317 = vector.broadcast %cst_95 : f32 to vector<16x128xf32>
    %318 = arith.addf %317, %316 : vector<16x128xf32>
    %cst_96 = arith.constant 5.000000e-01 : f32
    %319 = vector.broadcast %cst_96 : f32 to vector<16x128xf32>
    %320 = arith.mulf %319, %318 : vector<16x128xf32>
    %321 = arith.mulf %308, %320 : vector<16x128xf32>
    %322 = arith.truncf %321 : vector<16x128xf32> to vector<16x128xbf16>
    %c1_97 = arith.constant 1 : index
    %c0_98 = arith.constant 0 : index
    %c0_99 = arith.constant 0 : index
    %323 = vector.load %arg6[%c1_97, %c0_98, %c0_99] : memref<2x128x32xbf16, #tpu.memory_space<vmem>>, vector<1x128x32xbf16>
    %324 = vector.shape_cast %323 : vector<1x128x32xbf16> to vector<128x32xbf16>
    %cst_100 = arith.constant dense<0.000000e+00> : vector<16x32xf32>
    %325 = tpu.matmul %322, %324, %cst_100 {dimension_numbers = #tpu.dot_dimension_numbers<[1], [0], [0], [1], [0, 0, 1, 1], [], []>} : vector<16x128xbf16>, vector<128x32xbf16>, vector<16x32xf32> -> vector<16x32xf32>
    %326 = vector.broadcast %182 : vector<1x32xf32> to vector<16x32xf32>
    %327 = arith.addf %325, %326 : vector<16x32xf32>
    %328 = arith.addf %280, %327 : vector<16x32xf32>
    %c0_101 = arith.constant 0 : index
    %c0_102 = arith.constant 0 : index
    %329 = vector.load %arg8[%c0_101, %c0_102] : memref<3x128xf32, #tpu.memory_space<vmem>>, vector<1x32xf32>
    %c1_103 = arith.constant 1 : index
    %c0_104 = arith.constant 0 : index
    %330 = vector.load %arg8[%c1_103, %c0_104] : memref<3x128xf32, #tpu.memory_space<vmem>>, vector<1x32xf32>
    %cst_105 = arith.constant dense<0.000000e+00> : vector<16xf32>
    %331 = vector.multi_reduction <add>, %328, %cst_105 [1] : vector<16x32xf32> to vector<16xf32>
    %332 = vector.shape_cast %331 : vector<16xf32> to vector<16x1xf32>
    %cst_106 = arith.constant 3.200000e+01 : f32
    %333 = vector.broadcast %cst_106 : f32 to vector<16x1xf32>
    %334 = arith.divf %332, %333 : vector<16x1xf32>
    %335 = vector.broadcast %334 : vector<16x1xf32> to vector<16x32xf32>
    %336 = arith.subf %328, %335 : vector<16x32xf32>
    %337 = arith.mulf %336, %336 : vector<16x32xf32>
    %cst_107 = arith.constant dense<0.000000e+00> : vector<16xf32>
    %338 = vector.multi_reduction <add>, %337, %cst_107 [1] : vector<16x32xf32> to vector<16xf32>
    %339 = vector.shape_cast %338 : vector<16xf32> to vector<16x1xf32>
    %cst_108 = arith.constant 3.200000e+01 : f32
    %340 = vector.broadcast %cst_108 : f32 to vector<16x1xf32>
    %341 = arith.divf %339, %340 : vector<16x1xf32>
    %342 = vector.broadcast %334 : vector<16x1xf32> to vector<16x32xf32>
    %343 = arith.subf %328, %342 : vector<16x32xf32>
    %cst_109 = arith.constant 9.99999974E-6 : f32
    %344 = vector.broadcast %cst_109 : f32 to vector<16x1xf32>
    %345 = arith.addf %341, %344 : vector<16x1xf32>
    %346 = math.rsqrt %345 : vector<16x1xf32>
    %347 = vector.broadcast %346 : vector<16x1xf32> to vector<16x32xf32>
    %348 = arith.mulf %343, %347 : vector<16x32xf32>
    %349 = vector.broadcast %329 : vector<1x32xf32> to vector<16x32xf32>
    %350 = arith.mulf %348, %349 : vector<16x32xf32>
    %351 = vector.broadcast %330 : vector<1x32xf32> to vector<16x32xf32>
    %352 = arith.addf %350, %351 : vector<16x32xf32>
    %353 = arith.truncf %352 : vector<16x32xf32> to vector<16x32xbf16>
    %c0_110 = arith.constant 0 : index
    %c0_111 = arith.constant 0 : index
    %354 = vector.load %arg9[%c0_110, %c0_111] : memref<32x128xbf16, #tpu.memory_space<vmem>>, vector<32x128xbf16>
    %c2_112 = arith.constant 2 : index
    %c0_113 = arith.constant 0 : index
    %355 = vector.load %arg8[%c2_112, %c0_113] : memref<3x128xf32, #tpu.memory_space<vmem>>, vector<1x128xf32>
    %cst_114 = arith.constant dense<0.000000e+00> : vector<16x128xf32>
    %356 = tpu.matmul %353, %354, %cst_114 {dimension_numbers = #tpu.dot_dimension_numbers<[1], [0], [0], [1], [0, 0, 1, 1], [], []>} : vector<16x32xbf16>, vector<32x128xbf16>, vector<16x128xf32> -> vector<16x128xf32>
    %357 = vector.broadcast %355 : vector<1x128xf32> to vector<16x128xf32>
    %358 = arith.addf %356, %357 : vector<16x128xf32>
    %c0_115 = arith.constant 0 : index
    %c0_116 = arith.constant 0 : index
    %359 = vector.load %arg10[%c0_115, %c0_116] : memref<16x128xf32, #tpu.memory_space<vmem>>, vector<16x128xf32>
    tpu.vector_store %arg10[%c0_115, %c0_116], %358 {strides = array<i32>} : memref<16x128xf32, #tpu.memory_space<vmem>>, vector<16x128xf32>,
    return
  }
}

</mosaic_0001>

<llo_original>
// kernel: tpu_custom_call.1
$region0: #{tpu_custom_call.1}
  #allocation0 [shape = 'u32[]', space=smem, size = 0x4, offset = 0x4, fixed_abs, tag = 'smem constant byte address 0x4 - core index']
  #allocation1 [shape = 'u32[72,128]{1,0:T(1,128)}', space=vmem, size = 0x9000, scoped, tag = 'internal scratch']
  %s0 = inlined_call_operand.vmem [shape: f32[16,32], index: 0, kind: input, shape index: {}]
  %s1 = inlined_call_operand.hbm [shape: f32[16,32], index: 1, kind: input, shape index: {}]
  %s2 = inlined_call_operand.hbm [shape: bf16[32,32], index: 2, kind: input, shape index: {}]
  %s3 = inlined_call_operand.vmem [shape: bf16[2,3,32,32], index: 3, kind: input, shape index: {}]
  %s4 = inlined_call_operand.vmem [shape: bf16[2,32,32], index: 4, kind: input, shape index: {}]
  %s5 = inlined_call_operand.vmem [shape: bf16[2,32,128], index: 5, kind: input, shape index: {}]
  %s6 = inlined_call_operand.vmem [shape: bf16[2,128,32], index: 6, kind: input, shape index: {}]
  %s7 = inlined_call_operand.vmem [shape: f32[2,10,128], index: 7, kind: input, shape index: {}]
  %s8 = inlined_call_operand.vmem [shape: f32[3,128], index: 8, kind: input, shape index: {}]
  %s9 = inlined_call_operand.hbm [shape: bf16[32,128], index: 9, kind: input, shape index: {}]
  %s10 = inlined_call_operand.hbm [shape: f32[16,128], index: 10, kind: output, shape index: {}]
  %s11 = sld [smem:[#allocation0]]
  $region62: #{tpu_custom_call.1} parent=0
    _
  %s13 = ssub.s32 1, %s11
  %s14 = scalar_select 0, %s13, %s11
  $region1: #{tpu_custom_call.1} parent=0
    #allocation2 [shape = 'u8[8192]{0}', space=vmem, size = 0x2000, scoped, tag = 'input window, operand 1, single buffered']
    #allocation3 [shape = 's32[1]{0}', space=sflag, size = 0x4, scoped, tag = 'scoped memory for tpu_custom_call.1']
    #allocation4 [shape = 's32[1]{0}', space=sflag, size = 0x4, scoped, tag = 'scoped memory for tpu_custom_call.1']
    #allocation5 [shape = 'u8[8192]{0}', space=vmem, size = 0x2000, scoped, tag = 'input window, operand 2, single buffered']
    #allocation6 [shape = 's32[1]{0}', space=sflag, size = 0x4, scoped, tag = 'scoped memory for tpu_custom_call.1']
    #allocation7 [shape = 'u8[8192]{0}', space=vmem, size = 0x2000, scoped, tag = 'input window, operand 9, single buffered']
    #allocation8 [shape = 'u8[8192]{0}', space=vmem, size = 0x2000, scoped, tag = 'output window, operand 0, single buffered']
    %15 = vsyncpa [#allocation3], 0
    %16 = vsyncpa [#allocation6], 0
    %17 = vsyncpa [#allocation4], 0
    // Predicated region
    $region2: #{tpu_custom_call.1} parent=1 // pred_check
      _
    $region3: #{tpu_custom_call.1} parent=1 // pred_check_branch
      %19 = sbr.rel (0) target = $region5
    $region4: #{tpu_custom_call.1} parent=1 // pred_region
      _
    $region5: #{tpu_custom_call.1} parent=1 // pred_fallthru
      _
    // Predicated region
    $region6: #{tpu_custom_call.1} parent=1 // pred_check
      _
    $region7: #{tpu_custom_call.1} parent=1 // pred_check_branch
      %21 = sbr.rel (0) target = $region9
    $region8: #{tpu_custom_call.1} parent=1 // pred_region
      %23 = vsyncadd [#allocation3], 0
      %s24 = sshll.u32 %s1, 4
      %s25 = int_to_ptr.hbm [resolvable:$true] %s24
      %s26 = sshll.u32 [#allocation2], 4
      %s27 = int_to_ptr.vmem [resolvable:$true] %s26
      %32 = dma.hbm_to_vmem [thread:$0]  %s25, 256, %s27, [#allocation3], 128, 128, 8
    $region9: #{tpu_custom_call.1} parent=1 // pred_fallthru
      _
    // Predicated region
    $region10: #{tpu_custom_call.1} parent=1 // pred_check
      _
    $region11: #{tpu_custom_call.1} parent=1 // pred_check_branch
      %34 = sbr.rel (0) target = $region13
    $region12: #{tpu_custom_call.1} parent=1 // pred_region
      %36 = vsyncadd [#allocation6], 0
      %s37 = sshll.u32 %s2, 4
      %s38 = int_to_ptr.hbm [resolvable:$true] %s37
      %s39 = sshll.u32 [#allocation5], 4
      %s40 = int_to_ptr.vmem [resolvable:$true] %s39
      %45 = dma.hbm_to_vmem [thread:$0]  %s38, 256, %s40, [#allocation6], 64, 64, 4
    $region13: #{tpu_custom_call.1} parent=1 // pred_fallthru
      _
    // Predicated region
    $region14: #{tpu_custom_call.1} parent=1 // pred_check
      _
    $region15: #{tpu_custom_call.1} parent=1 // pred_check_branch
      %47 = sbr.rel (0) target = $region17
    $region16: #{tpu_custom_call.1} parent=1 // pred_region
      _
    $region17: #{tpu_custom_call.1} parent=1 // pred_fallthru
      _
    // Predicated region
    $region18: #{tpu_custom_call.1} parent=1 // pred_check
      _
    $region19: #{tpu_custom_call.1} parent=1 // pred_check_branch
      %49 = sbr.rel (0) target = $region21
    $region20: #{tpu_custom_call.1} parent=1 // pred_region
      _
    $region21: #{tpu_custom_call.1} parent=1 // pred_fallthru
      _
    // Predicated region
    $region22: #{tpu_custom_call.1} parent=1 // pred_check
      _
    $region23: #{tpu_custom_call.1} parent=1 // pred_check_branch
      %51 = sbr.rel (0) target = $region25
    $region24: #{tpu_custom_call.1} parent=1 // pred_region
      _
    $region25: #{tpu_custom_call.1} parent=1 // pred_fallthru
      _
    // Predicated region
    $region26: #{tpu_custom_call.1} parent=1 // pred_check
      _
    $region27: #{tpu_custom_call.1} parent=1 // pred_check_branch
      %53 = sbr.rel (0) target = $region29
    $region28: #{tpu_custom_call.1} parent=1 // pred_region
      _
    $region29: #{tpu_custom_call.1} parent=1 // pred_fallthru
      _
    // Predicated region
    $region30: #{tpu_custom_call.1} parent=1 // pred_check
      _
    $region31: #{tpu_custom_call.1} parent=1 // pred_check_branch
      %55 = sbr.rel (0) target = $region33
    $region32: #{tpu_custom_call.1} parent=1 // pred_region
      _
    $region33: #{tpu_custom_call.1} parent=1 // pred_fallthru
      _
    // Predicated region
    $region34: #{tpu_custom_call.1} parent=1 // pred_check
      _
    $region35: #{tpu_custom_call.1} parent=1 // pred_check_branch
      %57 = sbr.rel (0) target = $region37
    $region36: #{tpu_custom_call.1} parent=1 // pred_region
      _
    $region37: #{tpu_custom_call.1} parent=1 // pred_fallthru
      _
    // Predicated region
    $region38: #{tpu_custom_call.1} parent=1 // pred_check
      _
    $region39: #{tpu_custom_call.1} parent=1 // pred_check_branch
      %59 = sbr.rel (0) target = $region41
    $region40: #{tpu_custom_call.1} parent=1 // pred_region
      %61 = vsyncadd [#allocation6], 0
      %s62 = sshll.u32 %s9, 4
      %s63 = int_to_ptr.hbm [resolvable:$true] %s62
      %s64 = sshll.u32 [#allocation7], 4
      %s65 = int_to_ptr.vmem [resolvable:$true] %s64
      %70 = dma.hbm_to_vmem [thread:$0]  %s63, 256, %s65, [#allocation6], 64, 64, 4
    $region41: #{tpu_custom_call.1} parent=1 // pred_fallthru
      _
    // Predicated region
    $region42: #{tpu_custom_call.1} parent=1 // pred_check
      _
    $region43: #{tpu_custom_call.1} parent=1 // pred_check_branch
      %72 = sbr.rel (0) target = $region45
    $region44: #{tpu_custom_call.1} parent=1 // pred_region
      %74 = dma.done [#allocation3], 256
    $region45: #{tpu_custom_call.1} parent=1 // pred_fallthru
      _
    // Predicated region
    $region46: #{tpu_custom_call.1} parent=1 // pred_check
      _
    $region47: #{tpu_custom_call.1} parent=1 // pred_check_branch
      %76 = sbr.rel (0) target = $region49
    $region48: #{tpu_custom_call.1} parent=1 // pred_region
      %78 = dma.done [#allocation6], 256
    $region49: #{tpu_custom_call.1} parent=1 // pred_fallthru
      _
    // Predicated region
    $region50: #{tpu_custom_call.1} parent=1 // pred_check
      _
    $region51: #{tpu_custom_call.1} parent=1 // pred_check_branch
      %80 = sbr.rel (0) target = $region53
    $region52: #{tpu_custom_call.1} parent=1 // pred_region
      %82 = dma.done [#allocation6], 256
    $region53: #{tpu_custom_call.1} parent=1 // pred_fallthru
      _
    %v84 = vld [vmem:[%s0] sm:$0xff]
    %v85 = vld [vmem:[%s0 + $0x8] sm:$0xff]
    %v86 = vpack.c.bf16 %v85, %v84
    %v87 = vld [vmem:[#allocation5] sm:$0xf]
    %v88 = vld [vmem:[#allocation5 + $0x4] sm:$0xf]
    %v89 = vld [vmem:[#allocation5 + $0x8] sm:$0xf]
    %v90 = vld [vmem:[#allocation5 + $0xc] sm:$0xf]
    %v91 = vld [vmem:[#allocation2] sm:$0xff]
    %v92 = vld [vmem:[#allocation2 + $0x8] sm:$0xff]
    %v97 = vunpack.c.l.b16 %v87
    %v98 = vunpack.c.l.b16 %v88
    %v99 = vunpack.c.l.b16 %v89
    %v100 = vunpack.c.l.b16 %v90
    %v101 = vpack.c.b16 %v98, %v97
    %v102 = vpack.c.b16 %v100, %v99
    %vm105 = vcmask 261120
    %v107 = vsel %vm105, %v86, 0
    %109 = vmatpush.bf16.msra.mxu0 0
    %110 = vmatpush.bf16.msra.mxu0 0
    %111 = vmatpush.bf16.msra.mxu0 0
    %112 = vmatpush.bf16.msra.mxu0 0
    %113 = vmatpush.bf16.msra.mxu0 0
    %114 = vmatpush.bf16.msra.mxu0 0
    %115 = vmatpush.bf16.msra.mxu0 %v102
    %116 = vmatpush.bf16.msra.mxu0 %v101
    %117 = vmatmul.bf16.gmra.mxu0 %v107
    %v118 = vpop.f32.mrf.mxu0
    %v119 = vadd.f32 %v91, %v118
    %v120 = vpop.f32.mrf.mxu0
    %v121 = vadd.f32 %v92, %v120
    %122 = vdwg.mxu0
    %v123 = vlaneseq
    %v124 = vshrl.u32 %v123, 7
    %v125 = vlaneseq
    %v126 = vand.u32 %v125, 127
    %vm127 = vcmp.le.s32.totalorder %v126, %v124
    %v128 = vsel %vm127, 0.0, -1e+30
    %v129 = vld [vmem:[%s7] sm:$0xff]
    %v130 = vld [vmem:[%s7 + $0x8] sm:$0x3]
    %v131 = vsel %vm105, %v119, 0.0
    %132 = vadd.xlane.f32.xlu0 %v131
    %v133 = vpop.xlane.xlu0 %132
    %v134 = vsel %vm105, %v121, 0.0
    %135 = vadd.xlane.f32.xlu0 %v134
    %v136 = vpop.xlane.xlu0 %135
    %v137 = vrcp.pop 32.0
    %v138 = vmul.f32 32.0, %v137
    %v139 = vsub.f32 1.0, %v138
    %v140 = vmul.f32 %v137, %v139
    %v141 = vadd.f32 %v137, %v140
    %vm142 = vweird.f32 %v137
    %v143 = vsel %vm142, %v137, %v141
    %v144 = vmul.f32 %v133, %v143
    %v145 = vmul.f32 %v136, %v143
    %v146 = vsub.f32 %v119, %v144
    %v147 = vsub.f32 %v121, %v145
    %v148 = vmul.f32 %v146, %v146
    %v149 = vmul.f32 %v147, %v147
    %v150 = vsel %vm105, %v148, 0.0
    %151 = vadd.xlane.f32.xlu0 %v150
    %v152 = vpop.xlane.xlu0 %151
    %v153 = vsel %vm105, %v149, 0.0
    %154 = vadd.xlane.f32.xlu0 %v153
    %v155 = vpop.xlane.xlu0 %154
    %v156 = vmul.f32 %v152, %v143
    %v157 = vmul.f32 %v155, %v143
    %v158 = vadd.f32 %v156, 1e-05
    %v159 = vadd.f32 %v157, 1e-05
    %v160 = vrsqrt.pop %v158
    %v161 = vmul.f32 %v160, %v158
    %v162 = vmul.f32 %v161, %v160
    %v163 = vmul.f32 0.5, %v162
    %v164 = vsub.f32 1.5, %v163
    %v165 = vmul.f32 %v160, %v164
    %vm166 = vweird.f32 %v158
    %vm167 = vweird.f32 %v160
    %vm168 = vmor %vm166, %vm167
    %v169 = vsel %vm168, %v160, %v165
    %v170 = vrsqrt.pop %v159
    %v171 = vmul.f32 %v170, %v159
    %v172 = vmul.f32 %v171, %v170
    %v173 = vmul.f32 0.5, %v172
    %v174 = vsub.f32 1.5, %v173
    %v175 = vmul.f32 %v170, %v174
    %vm176 = vweird.f32 %v159
    %vm177 = vweird.f32 %v170
    %vm178 = vmor %vm176, %vm177
    %v179 = vsel %vm178, %v170, %v175
    %v180 = vmul.f32 %v146, %v169
    %v181 = vmul.f32 %v147, %v179
    %v182 = vperm.slane %v129, 0
    %v183 = vmul.f32 %v180, %v182
    %v184 = vmul.f32 %v181, %v182
    %v185 = vperm.slane %v129, 1
    %v186 = vadd.f32 %v183, %v185
    %v187 = vadd.f32 %v184, %v185
    %v188 = vpack.c.bf16 %v187, %v186
    %v189 = vld [vmem:[%s3] sm:$0xf]
    %v190 = vld [vmem:[%s3 + $0x4] sm:$0xf]
    %v191 = vld [vmem:[%s3 + $0x8] sm:$0xf]
    %v192 = vld [vmem:[%s3 + $0xc] sm:$0xf]
    %v193 = vperm.slane %v129, 2
    %v198 = vunpack.c.l.b16 %v189
    %v199 = vunpack.c.l.b16 %v190
    %v200 = vunpack.c.l.b16 %v191
    %v201 = vunpack.c.l.b16 %v192
    %v202 = vpack.c.b16 %v199, %v198
    %v203 = vpack.c.b16 %v201, %v200
    %v207 = vsel %vm105, %v188, 0
    %209 = vmatpush.bf16.msra.mxu0 0
    %210 = vmatpush.bf16.msra.mxu0 0
    %211 = vmatpush.bf16.msra.mxu0 0
    %212 = vmatpush.bf16.msra.mxu0 0
    %213 = vmatpush.bf16.msra.mxu0 0
    %214 = vmatpush.bf16.msra.mxu0 0
    %215 = vmatpush.bf16.msra.mxu0 %v203
    %216 = vmatpush.bf16.msra.mxu0 %v202
    %217 = vmatmul.bf16.gmra.mxu0 %v207
    %v218 = vpop.f32.mrf.mxu0
    %v219 = vadd.f32 %v193, %v218
    %v220 = vpop.f32.mrf.mxu0
    %v221 = vadd.f32 %v193, %v220
    %222 = vdwg.mxu0
    %s223 = scalar_lea.vmem %s3, 16
    %v224 = vld [vmem:[%s223] sm:$0xf]
    %v225 = vld [vmem:[%s223 + $0x4] sm:$0xf]
    %v226 = vld [vmem:[%s223 + $0x8] sm:$0xf]
    %v227 = vld [vmem:[%s223 + $0xc] sm:$0xf]
    %v228 = vperm.slane %v129, 3
    %v233 = vunpack.c.l.b16 %v224
    %v234 = vunpack.c.l.b16 %v225
    %v235 = vunpack.c.l.b16 %v226
    %v236 = vunpack.c.l.b16 %v227
    %v237 = vpack.c.b16 %v234, %v233
    %v238 = vpack.c.b16 %v236, %v235
    %241 = vmatpush.bf16.msra.mxu0 0
    %242 = vmatpush.bf16.msra.mxu0 0
    %243 = vmatpush.bf16.msra.mxu0 0
    %244 = vmatpush.bf16.msra.mxu0 0
    %245 = vmatpush.bf16.msra.mxu0 0
    %246 = vmatpush.bf16.msra.mxu0 0
    %247 = vmatpush.bf16.msra.mxu0 %v238
    %248 = vmatpush.bf16.msra.mxu0 %v237
    %249 = vmatmul.bf16.gmra.mxu0 %v207
    %v250 = vpop.f32.mrf.mxu0
    %v251 = vadd.f32 %v228, %v250
    %v252 = vpop.f32.mrf.mxu0
    %v253 = vadd.f32 %v228, %v252
    %254 = vdwg.mxu0
    %s255 = scalar_lea.vmem %s3, 32
    %v256 = vld [vmem:[%s255] sm:$0xf]
    %v257 = vld [vmem:[%s255 + $0x4] sm:$0xf]
    %v258 = vld [vmem:[%s255 + $0x8] sm:$0xf]
    %v259 = vld [vmem:[%s255 + $0xc] sm:$0xf]
    %v260 = vperm.slane %v129, 4
    %v265 = vunpack.c.l.b16 %v256
    %v266 = vunpack.c.l.b16 %v257
    %v267 = vunpack.c.l.b16 %v258
    %v268 = vunpack.c.l.b16 %v259
    %v269 = vpack.c.b16 %v266, %v265
    %v270 = vpack.c.b16 %v268, %v267
    %273 = vmatpush.bf16.msra.mxu0 0
    %274 = vmatpush.bf16.msra.mxu0 0
    %275 = vmatpush.bf16.msra.mxu0 0
    %276 = vmatpush.bf16.msra.mxu0 0
    %277 = vmatpush.bf16.msra.mxu0 0
    %278 = vmatpush.bf16.msra.mxu0 0
    %279 = vmatpush.bf16.msra.mxu0 %v270
    %280 = vmatpush.bf16.msra.mxu0 %v269
    %281 = vmatmul.bf16.gmra.mxu0 %v207
    %v282 = vpop.f32.mrf.mxu0
    %v283 = vadd.f32 %v260, %v282
    %v284 = vpop.f32.mrf.mxu0
    %v285 = vadd.f32 %v260, %v284
    %286 = vdwg.mxu0
    %289 = vrot.lane.b32.xlu0 %v219, 120
    %v290 = vpop.permute.xlu0 %289
    %291 = vrot.lane.b32.xlu0 %v221, 120
    %v292 = vpop.permute.xlu0 %291
    %295 = vrot.lane.b32.xlu0 %v219, 112
    %v296 = vpop.permute.xlu0 %295
    %297 = vrot.lane.b32.xlu0 %v221, 112
    %v298 = vpop.permute.xlu0 %297
    %301 = vrot.lane.b32.xlu0 %v219, 104
    %v302 = vpop.permute.xlu0 %301
    %303 = vrot.lane.b32.xlu0 %v221, 104
    %v304 = vpop.permute.xlu0 %303
    %v307 = vpack.c.bf16 %v219, %v219
    %v308 = vpack.c.bf16 %v221, %v221
    %v309 = vpack.c.bf16 %v290, %v290
    %v310 = vpack.c.bf16 %v292, %v292
    %v311 = vpack.c.bf16 %v296, %v296
    %v312 = vpack.c.bf16 %v298, %v298
    %v313 = vpack.c.bf16 %v302, %v302
    %v314 = vpack.c.bf16 %v304, %v304
    %317 = vrot.lane.b32.xlu0 %v251, 120
    %v318 = vpop.permute.xlu0 %317
    %319 = vrot.lane.b32.xlu0 %v253, 120
    %v320 = vpop.permute.xlu0 %319
    %323 = vrot.lane.b32.xlu0 %v251, 112
    %v324 = vpop.permute.xlu0 %323
    %325 = vrot.lane.b32.xlu0 %v253, 112
    %v326 = vpop.permute.xlu0 %325
    %329 = vrot.lane.b32.xlu0 %v251, 104
    %v330 = vpop.permute.xlu0 %329
    %331 = vrot.lane.b32.xlu0 %v253, 104
    %v332 = vpop.permute.xlu0 %331
    %v335 = vpack.c.bf16 %v251, %v251
    %v336 = vpack.c.bf16 %v253, %v253
    %v337 = vpack.c.bf16 %v318, %v318
    %v338 = vpack.c.bf16 %v320, %v320
    %v339 = vpack.c.bf16 %v324, %v324
    %v340 = vpack.c.bf16 %v326, %v326
    %v341 = vpack.c.bf16 %v330, %v330
    %v342 = vpack.c.bf16 %v332, %v332
    %345 = vrot.lane.b32.xlu0 %v283, 120
    %v346 = vpop.permute.xlu0 %345
    %347 = vrot.lane.b32.xlu0 %v285, 120
    %v348 = vpop.permute.xlu0 %347
    %351 = vrot.lane.b32.xlu0 %v283, 112
    %v352 = vpop.permute.xlu0 %351
    %353 = vrot.lane.b32.xlu0 %v285, 112
    %v354 = vpop.permute.xlu0 %353
    %357 = vrot.lane.b32.xlu0 %v283, 104
    %v358 = vpop.permute.xlu0 %357
    %359 = vrot.lane.b32.xlu0 %v285, 104
    %v360 = vpop.permute.xlu0 %359
    %v363 = vpack.c.bf16 %v283, %v283
    %v364 = vpack.c.bf16 %v285, %v285
    %v365 = vpack.c.bf16 %v346, %v346
    %v366 = vpack.c.bf16 %v348, %v348
    %v367 = vpack.c.bf16 %v352, %v352
    %v368 = vpack.c.bf16 %v354, %v354
    %v369 = vpack.c.bf16 %v358, %v358
    %v370 = vpack.c.bf16 %v360, %v360
    %vm371 = vcmask 64512
    %v373 = vsel %vm371, %v307, 0
    %v376 = vsel %vm371, %v335, 0
    %378 = vmatpush.bf16.xpose.msra.mxu0 0
    %379 = vmatpush.bf16.xpose.msra.mxu0 0
    %380 = vmatpush.bf16.xpose.msra.mxu0 0
    %381 = vmatpush.bf16.xpose.msra.mxu0 0
    %382 = vmatpush.bf16.xpose.msra.mxu0 0
    %383 = vmatpush.bf16.xpose.msra.mxu0 0
    %384 = vmatpush.bf16.xpose.msra.mxu0 0
    %385 = vmatpush.bf16.xpose.msra.mxu0 %v376
    %386 = vmatmul.bf16.gmra.mxu0 %v373
    %v387 = vpop.f32.mrf.mxu0
    %v388 = vadd.f32 %v128, %v387
    %v389 = vpop.f32.mrf.mxu0
    %390 = vdwg.mxu0
    %v392 = vsel %vm371, %v308, 0
    %v395 = vsel %vm371, %v336, 0
    %397 = vmatpush.bf16.xpose.msra.mxu0 0
    %398 = vmatpush.bf16.xpose.msra.mxu0 0
    %399 = vmatpush.bf16.xpose.msra.mxu0 0
    %400 = vmatpush.bf16.xpose.msra.mxu0 0
    %401 = vmatpush.bf16.xpose.msra.mxu0 0
    %402 = vmatpush.bf16.xpose.msra.mxu0 0
    %403 = vmatpush.bf16.xpose.msra.mxu0 0
    %404 = vmatpush.bf16.xpose.msra.mxu0 %v395
    %405 = vmatmul.bf16.gmra.mxu0 %v392
    %v406 = vpop.f32.mrf.mxu0
    %v407 = vadd.f32 %v128, %v406
    %v408 = vpop.f32.mrf.mxu0
    %409 = vdwg.mxu0
    %v411 = vsel %vm371, %v309, 0
    %v414 = vsel %vm371, %v337, 0
    %416 = vmatpush.bf16.xpose.msra.mxu0 0
    %417 = vmatpush.bf16.xpose.msra.mxu0 0
    %418 = vmatpush.bf16.xpose.msra.mxu0 0
    %419 = vmatpush.bf16.xpose.msra.mxu0 0
    %420 = vmatpush.bf16.xpose.msra.mxu0 0
    %421 = vmatpush.bf16.xpose.msra.mxu0 0
    %422 = vmatpush.bf16.xpose.msra.mxu0 0
    %423 = vmatpush.bf16.xpose.msra.mxu0 %v414
    %424 = vmatmul.bf16.gmra.mxu0 %v411
    %v425 = vpop.f32.mrf.mxu0
    %v426 = vadd.f32 %v128, %v425
    %v427 = vpop.f32.mrf.mxu0
    %428 = vdwg.mxu0
    %v430 = vsel %vm371, %v310, 0
    %v433 = vsel %vm371, %v338, 0
    %435 = vmatpush.bf16.xpose.msra.mxu0 0
    %436 = vmatpush.bf16.xpose.msra.mxu0 0
    %437 = vmatpush.bf16.xpose.msra.mxu0 0
    %438 = vmatpush.bf16.xpose.msra.mxu0 0
    %439 = vmatpush.bf16.xpose.msra.mxu0 0
    %440 = vmatpush.bf16.xpose.msra.mxu0 0
    %441 = vmatpush.bf16.xpose.msra.mxu0 0
    %442 = vmatpush.bf16.xpose.msra.mxu0 %v433
    %443 = vmatmul.bf16.gmra.mxu0 %v430
    %v444 = vpop.f32.mrf.mxu0
    %v445 = vadd.f32 %v128, %v444
    %v446 = vpop.f32.mrf.mxu0
    %447 = vdwg.mxu0
    %v449 = vsel %vm371, %v311, 0
    %v452 = vsel %vm371, %v339, 0
    %454 = vmatpush.bf16.xpose.msra.mxu0 0
    %455 = vmatpush.bf16.xpose.msra.mxu0 0
    %456 = vmatpush.bf16.xpose.msra.mxu0 0
    %457 = vmatpush.bf16.xpose.msra.mxu0 0
    %458 = vmatpush.bf16.xpose.msra.mxu0 0
    %459 = vmatpush.bf16.xpose.msra.mxu0 0
    %460 = vmatpush.bf16.xpose.msra.mxu0 0
    %461 = vmatpush.bf16.xpose.msra.mxu0 %v452
    %462 = vmatmul.bf16.gmra.mxu0 %v449
    %v463 = vpop.f32.mrf.mxu0
    %v464 = vadd.f32 %v128, %v463
    %v465 = vpop.f32.mrf.mxu0
    %466 = vdwg.mxu0
    %v468 = vsel %vm371, %v312, 0
    %v471 = vsel %vm371, %v340, 0
    %473 = vmatpush.bf16.xpose.msra.mxu0 0
    %474 = vmatpush.bf16.xpose.msra.mxu0 0
    %475 = vmatpush.bf16.xpose.msra.mxu0 0
    %476 = vmatpush.bf16.xpose.msra.mxu0 0
    %477 = vmatpush.bf16.xpose.msra.mxu0 0
    %478 = vmatpush.bf16.xpose.msra.mxu0 0
    %479 = vmatpush.bf16.xpose.msra.mxu0 0
    %480 = vmatpush.bf16.xpose.msra.mxu0 %v471
    %481 = vmatmul.bf16.gmra.mxu0 %v468
    %v482 = vpop.f32.mrf.mxu0
    %v483 = vadd.f32 %v128, %v482
    %v484 = vpop.f32.mrf.mxu0
    %485 = vdwg.mxu0
    %v487 = vsel %vm371, %v313, 0
    %v490 = vsel %vm371, %v341, 0
    %492 = vmatpush.bf16.xpose.msra.mxu0 0
    %493 = vmatpush.bf16.xpose.msra.mxu0 0
    %494 = vmatpush.bf16.xpose.msra.mxu0 0
    %495 = vmatpush.bf16.xpose.msra.mxu0 0
    %496 = vmatpush.bf16.xpose.msra.mxu0 0
    %497 = vmatpush.bf16.xpose.msra.mxu0 0
    %498 = vmatpush.bf16.xpose.msra.mxu0 0
    %499 = vmatpush.bf16.xpose.msra.mxu0 %v490
    %500 = vmatmul.bf16.gmra.mxu0 %v487
    %v501 = vpop.f32.mrf.mxu0
    %v502 = vadd.f32 %v128, %v501
    %v503 = vpop.f32.mrf.mxu0
    %504 = vdwg.mxu0
    %v506 = vsel %vm371, %v314, 0
    %v509 = vsel %vm371, %v342, 0
    %511 = vmatpush.bf16.xpose.msra.mxu0 0
    %512 = vmatpush.bf16.xpose.msra.mxu0 0
    %513 = vmatpush.bf16.xpose.msra.mxu0 0
    %514 = vmatpush.bf16.xpose.msra.mxu0 0
    %515 = vmatpush.bf16.xpose.msra.mxu0 0
    %516 = vmatpush.bf16.xpose.msra.mxu0 0
    %517 = vmatpush.bf16.xpose.msra.mxu0 0
    %518 = vmatpush.bf16.xpose.msra.mxu0 %v509
    %519 = vmatmul.bf16.gmra.mxu0 %v506
    %v520 = vpop.f32.mrf.mxu0
    %v521 = vadd.f32 %v128, %v520
    %v522 = vpop.f32.mrf.mxu0
    %523 = vdwg.mxu0
    %v524 = vsel %vm371, %v388, -inf
    %525 = vmax.xlane.f32.xlu0 %v524
    %v526 = vpop.xlane.xlu0 %525
    %v527 = vsel %vm371, %v407, -inf
    %528 = vmax.xlane.f32.xlu0 %v527
    %v529 = vpop.xlane.xlu0 %528
    %v530 = vsel %vm371, %v426, -inf
    %531 = vmax.xlane.f32.xlu0 %v530
    %v532 = vpop.xlane.xlu0 %531
    %v533 = vsel %vm371, %v445, -inf
    %534 = vmax.xlane.f32.xlu0 %v533
    %v535 = vpop.xlane.xlu0 %534
    %v536 = vsel %vm371, %v464, -inf
    %537 = vmax.xlane.f32.xlu0 %v536
    %v538 = vpop.xlane.xlu0 %537
    %v539 = vsel %vm371, %v483, -inf
    %540 = vmax.xlane.f32.xlu0 %v539
    %v541 = vpop.xlane.xlu0 %540
    %v542 = vsel %vm371, %v502, -inf
    %543 = vmax.xlane.f32.xlu0 %v542
    %v544 = vpop.xlane.xlu0 %543
    %v545 = vsel %vm371, %v521, -inf
    %546 = vmax.xlane.f32.xlu0 %v545
    %v547 = vpop.xlane.xlu0 %546
    %v548 = vsub.f32 %v388, %v526
    %v549 = vsub.f32 %v407, %v529
    %v550 = vsub.f32 %v426, %v532
    %v551 = vsub.f32 %v445, %v535
    %v552 = vsub.f32 %v464, %v538
    %v553 = vsub.f32 %v483, %v541
    %v554 = vsub.f32 %v502, %v544
    %v555 = vsub.f32 %v521, %v547
    %v556 = vmul.f32 %v548, 1.442695
    %v557 = vpow.pop %v556
    %v558 = vmul.f32 %v549, 1.442695
    %v559 = vpow.pop %v558
    %v560 = vmul.f32 %v550, 1.442695
    %v561 = vpow.pop %v560
    %v562 = vmul.f32 %v551, 1.442695
    %v563 = vpow.pop %v562
    %v564 = vmul.f32 %v552, 1.442695
    %v565 = vpow.pop %v564
    %v566 = vmul.f32 %v553, 1.442695
    %v567 = vpow.pop %v566
    %v568 = vmul.f32 %v554, 1.442695
    %v569 = vpow.pop %v568
    %v570 = vmul.f32 %v555, 1.442695
    %v571 = vpow.pop %v570
    %v572 = vsel %vm371, %v557, 0.0
    %573 = vadd.xlane.f32.xlu0 %v572
    %v574 = vpop.xlane.xlu0 %573
    %v575 = vsel %vm371, %v559, 0.0
    %576 = vadd.xlane.f32.xlu0 %v575
    %v577 = vpop.xlane.xlu0 %576
    %v578 = vsel %vm371, %v561, 0.0
    %579 = vadd.xlane.f32.xlu0 %v578
    %v580 = vpop.xlane.xlu0 %579
    %v581 = vsel %vm371, %v563, 0.0
    %582 = vadd.xlane.f32.xlu0 %v581
    %v583 = vpop.xlane.xlu0 %582
    %v584 = vsel %vm371, %v565, 0.0
    %585 = vadd.xlane.f32.xlu0 %v584
    %v586 = vpop.xlane.xlu0 %585
    %v587 = vsel %vm371, %v567, 0.0
    %588 = vadd.xlane.f32.xlu0 %v587
    %v589 = vpop.xlane.xlu0 %588
    %v590 = vsel %vm371, %v569, 0.0
    %591 = vadd.xlane.f32.xlu0 %v590
    %v592 = vpop.xlane.xlu0 %591
    %v593 = vsel %vm371, %v571, 0.0
    %594 = vadd.xlane.f32.xlu0 %v593
    %v595 = vpop.xlane.xlu0 %594
    %v596 = vrcp.pop %v574
    %v597 = vmul.f32 %v574, %v596
    %v598 = vsub.f32 1.0, %v597
    %v599 = vmul.f32 %v596, %v598
    %v600 = vadd.f32 %v596, %v599
    %vm601 = vweird.f32 %v574
    %vm602 = vweird.f32 %v596
    %vm603 = vmor %vm601, %vm602
    %v604 = vsel %vm603, %v596, %v600
    %v605 = vand.u32 2147483647, %v574
    %vm606 = vcmp.eq.f32.partialorder %v605, 8.507059e+37
    %v607 = vand.u32 %v574, 2147483648
    %v608 = vor.u32 1.1754944e-38, %v607
    %v609 = vsel %vm606, %v608, %v604
    %v610 = vmul.f32 %v557, %v609
    %v611 = vrcp.pop %v577
    %v612 = vmul.f32 %v577, %v611
    %v613 = vsub.f32 1.0, %v612
    %v614 = vmul.f32 %v611, %v613
    %v615 = vadd.f32 %v611, %v614
    %vm616 = vweird.f32 %v577
    %vm617 = vweird.f32 %v611
    %vm618 = vmor %vm616, %vm617
    %v619 = vsel %vm618, %v611, %v615
    %v620 = vand.u32 2147483647, %v577
    %vm621 = vcmp.eq.f32.partialorder %v620, 8.507059e+37
    %v622 = vand.u32 %v577, 2147483648
    %v623 = vor.u32 1.1754944e-38, %v622
    %v624 = vsel %vm621, %v623, %v619
    %v625 = vmul.f32 %v559, %v624
    %v626 = vrcp.pop %v580
    %v627 = vmul.f32 %v580, %v626
    %v628 = vsub.f32 1.0, %v627
    %v629 = vmul.f32 %v626, %v628
    %v630 = vadd.f32 %v626, %v629
    %vm631 = vweird.f32 %v580
    %vm632 = vweird.f32 %v626
    %vm633 = vmor %vm631, %vm632
    %v634 = vsel %vm633, %v626, %v630
    %v635 = vand.u32 2147483647, %v580
    %vm636 = vcmp.eq.f32.partialorder %v635, 8.507059e+37
    %v637 = vand.u32 %v580, 2147483648
    %v638 = vor.u32 1.1754944e-38, %v637
    %v639 = vsel %vm636, %v638, %v634
    %v640 = vmul.f32 %v561, %v639
    %v641 = vrcp.pop %v583
    %v642 = vmul.f32 %v583, %v641
    %v643 = vsub.f32 1.0, %v642
    %v644 = vmul.f32 %v641, %v643
    %v645 = vadd.f32 %v641, %v644
    %vm646 = vweird.f32 %v583
    %vm647 = vweird.f32 %v641
    %vm648 = vmor %vm646, %vm647
    %v649 = vsel %vm648, %v641, %v645
    %v650 = vand.u32 2147483647, %v583
    %vm651 = vcmp.eq.f32.partialorder %v650, 8.507059e+37
    %v652 = vand.u32 %v583, 2147483648
    %v653 = vor.u32 1.1754944e-38, %v652
    %v654 = vsel %vm651, %v653, %v649
    %v655 = vmul.f32 %v563, %v654
    %v656 = vrcp.pop %v586
    %v657 = vmul.f32 %v586, %v656
    %v658 = vsub.f32 1.0, %v657
    %v659 = vmul.f32 %v656, %v658
    %v660 = vadd.f32 %v656, %v659
    %vm661 = vweird.f32 %v586
    %vm662 = vweird.f32 %v656
    %vm663 = vmor %vm661, %vm662
    %v664 = vsel %vm663, %v656, %v660
    %v665 = vand.u32 2147483647, %v586
    %vm666 = vcmp.eq.f32.partialorder %v665, 8.507059e+37
    %v667 = vand.u32 %v586, 2147483648
    %v668 = vor.u32 1.1754944e-38, %v667
    %v669 = vsel %vm666, %v668, %v664
    %v670 = vmul.f32 %v565, %v669
    %v671 = vrcp.pop %v589
    %v672 = vmul.f32 %v589, %v671
    %v673 = vsub.f32 1.0, %v672
    %v674 = vmul.f32 %v671, %v673
    %v675 = vadd.f32 %v671, %v674
    %vm676 = vweird.f32 %v589
    %vm677 = vweird.f32 %v671
    %vm678 = vmor %vm676, %vm677
    %v679 = vsel %vm678, %v671, %v675
    %v680 = vand.u32 2147483647, %v589
    %vm681 = vcmp.eq.f32.partialorder %v680, 8.507059e+37
    %v682 = vand.u32 %v589, 2147483648
    %v683 = vor.u32 1.1754944e-38, %v682
    %v684 = vsel %vm681, %v683, %v679
    %v685 = vmul.f32 %v567, %v684
    %v686 = vrcp.pop %v592
    %v687 = vmul.f32 %v592, %v686
    %v688 = vsub.f32 1.0, %v687
    %v689 = vmul.f32 %v686, %v688
    %v690 = vadd.f32 %v686, %v689
    %vm691 = vweird.f32 %v592
    %vm692 = vweird.f32 %v686
    %vm693 = vmor %vm691, %vm692
    %v694 = vsel %vm693, %v686, %v690
    %v695 = vand.u32 2147483647, %v592
    %vm696 = vcmp.eq.f32.partialorder %v695, 8.507059e+37
    %v697 = vand.u32 %v592, 2147483648
    %v698 = vor.u32 1.1754944e-38, %v697
    %v699 = vsel %vm696, %v698, %v694
    %v700 = vmul.f32 %v569, %v699
    %v701 = vrcp.pop %v595
    %v702 = vmul.f32 %v595, %v701
    %v703 = vsub.f32 1.0, %v702
    %v704 = vmul.f32 %v701, %v703
    %v705 = vadd.f32 %v701, %v704
    %vm706 = vweird.f32 %v595
    %vm707 = vweird.f32 %v701
    %vm708 = vmor %vm706, %vm707
    %v709 = vsel %vm708, %v701, %v705
    %v710 = vand.u32 2147483647, %v595
    %vm711 = vcmp.eq.f32.partialorder %v710, 8.507059e+37
    %v712 = vand.u32 %v595, 2147483648
    %v713 = vor.u32 1.1754944e-38, %v712
    %v714 = vsel %vm711, %v713, %v709
    %v715 = vmul.f32 %v571, %v714
    %v716 = vpack.c.bf16 %v610, %v610
    %v717 = vpack.c.bf16 %v625, %v625
    %v718 = vpack.c.bf16 %v640, %v640
    %v719 = vpack.c.bf16 %v655, %v655
    %v720 = vpack.c.bf16 %v670, %v670
    %v721 = vpack.c.bf16 %v685, %v685
    %v722 = vpack.c.bf16 %v700, %v700
    %v723 = vpack.c.bf16 %v715, %v715
    %v725 = vsel %vm371, %v716, 0
    %vm727 = vcmask 1043456
    %v729 = vsel %vm727, %v363, 0
    %731 = vmatpush.bf16.msra.mxu0 0
    %732 = vmatpush.bf16.msra.mxu0 0
    %733 = vmatpush.bf16.msra.mxu0 0
    %734 = vmatpush.bf16.msra.mxu0 0
    %735 = vmatpush.bf16.msra.mxu0 0
    %736 = vmatpush.bf16.msra.mxu0 0
    %737 = vmatpush.bf16.msra.mxu0 0
    %738 = vmatpush.bf16.msra.mxu0 %v729
    %739 = vmatmul.bf16.gmra.mxu0 %v725
    %v740 = vpop.f32.mrf.mxu0
    %v741 = vadd.f32 0.0, %v740
    %v742 = vpop.f32.mrf.mxu0
    %743 = vdwg.mxu0
    %v745 = vsel %vm371, %v717, 0
    %v748 = vsel %vm727, %v364, 0
    %750 = vmatpush.bf16.msra.mxu0 0
    %751 = vmatpush.bf16.msra.mxu0 0
    %752 = vmatpush.bf16.msra.mxu0 0
    %753 = vmatpush.bf16.msra.mxu0 0
    %754 = vmatpush.bf16.msra.mxu0 0
    %755 = vmatpush.bf16.msra.mxu0 0
    %756 = vmatpush.bf16.msra.mxu0 0
    %757 = vmatpush.bf16.msra.mxu0 %v748
    %758 = vmatmul.bf16.gmra.mxu0 %v745
    %v759 = vpop.f32.mrf.mxu0
    %v760 = vadd.f32 0.0, %v759
    %v761 = vpop.f32.mrf.mxu0
    %762 = vdwg.mxu0
    %v764 = vsel %vm371, %v718, 0
    %v767 = vsel %vm727, %v365, 0
    %769 = vmatpush.bf16.msra.mxu0 0
    %770 = vmatpush.bf16.msra.mxu0 0
    %771 = vmatpush.bf16.msra.mxu0 0
    %772 = vmatpush.bf16.msra.mxu0 0
    %773 = vmatpush.bf16.msra.mxu0 0
    %774 = vmatpush.bf16.msra.mxu0 0
    %775 = vmatpush.bf16.msra.mxu0 0
    %776 = vmatpush.bf16.msra.mxu0 %v767
    %777 = vmatmul.bf16.gmra.mxu0 %v764
    %v778 = vpop.f32.mrf.mxu0
    %v779 = vadd.f32 0.0, %v778
    %v780 = vpop.f32.mrf.mxu0
    %781 = vdwg.mxu0
    %v783 = vsel %vm371, %v719, 0
    %v786 = vsel %vm727, %v366, 0
    %788 = vmatpush.bf16.msra.mxu0 0
    %789 = vmatpush.bf16.msra.mxu0 0
    %790 = vmatpush.bf16.msra.mxu0 0
    %791 = vmatpush.bf16.msra.mxu0 0
    %792 = vmatpush.bf16.msra.mxu0 0
    %793 = vmatpush.bf16.msra.mxu0 0
    %794 = vmatpush.bf16.msra.mxu0 0
    %795 = vmatpush.bf16.msra.mxu0 %v786
    %796 = vmatmul.bf16.gmra.mxu0 %v783
    %v797 = vpop.f32.mrf.mxu0
    %v798 = vadd.f32 0.0, %v797
    %v799 = vpop.f32.mrf.mxu0
    %800 = vdwg.mxu0
    %v802 = vsel %vm371, %v720, 0
    %v805 = vsel %vm727, %v367, 0
    %807 = vmatpush.bf16.msra.mxu0 0
    %808 = vmatpush.bf16.msra.mxu0 0
    %809 = vmatpush.bf16.msra.mxu0 0
    %810 = vmatpush.bf16.msra.mxu0 0
    %811 = vmatpush.bf16.msra.mxu0 0
    %812 = vmatpush.bf16.msra.mxu0 0
    %813 = vmatpush.bf16.msra.mxu0 0
    %814 = vmatpush.bf16.msra.mxu0 %v805
    %815 = vmatmul.bf16.gmra.mxu0 %v802
    %v816 = vpop.f32.mrf.mxu0
    %v817 = vadd.f32 0.0, %v816
    %v818 = vpop.f32.mrf.mxu0
    %819 = vdwg.mxu0
    %v821 = vsel %vm371, %v721, 0
    %v824 = vsel %vm727, %v368, 0
    %826 = vmatpush.bf16.msra.mxu0 0
    %827 = vmatpush.bf16.msra.mxu0 0
    %828 = vmatpush.bf16.msra.mxu0 0
    %829 = vmatpush.bf16.msra.mxu0 0
    %830 = vmatpush.bf16.msra.mxu0 0
    %831 = vmatpush.bf16.msra.mxu0 0
    %832 = vmatpush.bf16.msra.mxu0 0
    %833 = vmatpush.bf16.msra.mxu0 %v824
    %834 = vmatmul.bf16.gmra.mxu0 %v821
    %v835 = vpop.f32.mrf.mxu0
    %v836 = vadd.f32 0.0, %v835
    %v837 = vpop.f32.mrf.mxu0
    %838 = vdwg.mxu0
    %v840 = vsel %vm371, %v722, 0
    %v843 = vsel %vm727, %v369, 0
    %845 = vmatpush.bf16.msra.mxu0 0
    %846 = vmatpush.bf16.msra.mxu0 0
    %847 = vmatpush.bf16.msra.mxu0 0
    %848 = vmatpush.bf16.msra.mxu0 0
    %849 = vmatpush.bf16.msra.mxu0 0
    %850 = vmatpush.bf16.msra.mxu0 0
    %851 = vmatpush.bf16.msra.mxu0 0
    %852 = vmatpush.bf16.msra.mxu0 %v843
    %853 = vmatmul.bf16.gmra.mxu0 %v840
    %v854 = vpop.f32.mrf.mxu0
    %v855 = vadd.f32 0.0, %v854
    %v856 = vpop.f32.mrf.mxu0
    %857 = vdwg.mxu0
    %v859 = vsel %vm371, %v723, 0
    %v862 = vsel %vm727, %v370, 0
    %864 = vmatpush.bf16.msra.mxu0 0
    %865 = vmatpush.bf16.msra.mxu0 0
    %866 = vmatpush.bf16.msra.mxu0 0
    %867 = vmatpush.bf16.msra.mxu0 0
    %868 = vmatpush.bf16.msra.mxu0 0
    %869 = vmatpush.bf16.msra.mxu0 0
    %870 = vmatpush.bf16.msra.mxu0 0
    %871 = vmatpush.bf16.msra.mxu0 %v862
    %872 = vmatmul.bf16.gmra.mxu0 %v859
    %v873 = vpop.f32.mrf.mxu0
    %v874 = vadd.f32 0.0, %v873
    %v875 = vpop.f32.mrf.mxu0
    %876 = vdwg.mxu0
    %879 = vrot.lane.b32.xlu0 %v779, 8
    %v880 = vpop.permute.xlu0 %879
    %881 = vrot.lane.b32.xlu0 %v798, 8
    %v882 = vpop.permute.xlu0 %881
    %887 = vrot.lane.b32.xlu0 %v817, 16
    %v888 = vpop.permute.xlu0 %887
    %889 = vrot.lane.b32.xlu0 %v836, 16
    %v890 = vpop.permute.xlu0 %889
    %895 = vrot.lane.b32.xlu0 %v855, 24
    %v896 = vpop.permute.xlu0 %895
    %897 = vrot.lane.b32.xlu0 %v874, 24
    %v898 = vpop.permute.xlu0 %897
    %v901 = vsel %vm371, %v741, %v880
    %v902 = vsel %vm371, %v760, %v882
    %vm903 = vcmask 130048
    %v904 = vsel %vm903, %v901, %v888
    %v905 = vsel %vm903, %v902, %v890
    %vm906 = vcmask 195584
    %v907 = vsel %vm906, %v904, %v896
    %v908 = vsel %vm906, %v905, %v898
    %v909 = vpack.c.bf16 %v908, %v907
    %v910 = vld [vmem:[%s4] sm:$0xf]
    %v911 = vld [vmem:[%s4 + $0x4] sm:$0xf]
    %v912 = vld [vmem:[%s4 + $0x8] sm:$0xf]
    %v913 = vld [vmem:[%s4 + $0xc] sm:$0xf]
    %v914 = vperm.slane %v129, 5
    %v919 = vunpack.c.l.b16 %v910
    %v920 = vunpack.c.l.b16 %v911
    %v921 = vunpack.c.l.b16 %v912
    %v922 = vunpack.c.l.b16 %v913
    %v923 = vpack.c.b16 %v920, %v919
    %v924 = vpack.c.b16 %v922, %v921
    %v928 = vsel %vm105, %v909, 0
    %930 = vmatpush.bf16.msra.mxu0 0
    %931 = vmatpush.bf16.msra.mxu0 0
    %932 = vmatpush.bf16.msra.mxu0 0
    %933 = vmatpush.bf16.msra.mxu0 0
    %934 = vmatpush.bf16.msra.mxu0 0
    %935 = vmatpush.bf16.msra.mxu0 0
    %936 = vmatpush.bf16.msra.mxu0 %v924
    %937 = vmatpush.bf16.msra.mxu0 %v923
    %938 = vmatmul.bf16.gmra.mxu0 %v928
    %v939 = vpop.f32.mrf.mxu0
    %v940 = vadd.f32 %v914, %v939
    %v941 = vpop.f32.mrf.mxu0
    %v942 = vadd.f32 %v914, %v941
    %943 = vdwg.mxu0
    %v944 = vadd.f32 %v119, %v940
    %v945 = vadd.f32 %v121, %v942
    %v946 = vsel %vm105, %v944, 0.0
    %947 = vadd.xlane.f32.xlu0 %v946
    %v948 = vpop.xlane.xlu0 %947
    %v949 = vsel %vm105, %v945, 0.0
    %950 = vadd.xlane.f32.xlu0 %v949
    %v951 = vpop.xlane.xlu0 %950
    %v952 = vmul.f32 %v948, %v143
    %v953 = vmul.f32 %v951, %v143
    %v954 = vsub.f32 %v944, %v952
    %v955 = vsub.f32 %v945, %v953
    %v956 = vmul.f32 %v954, %v954
    %v957 = vmul.f32 %v955, %v955
    %v958 = vsel %vm105, %v956, 0.0
    %959 = vadd.xlane.f32.xlu0 %v958
    %v960 = vpop.xlane.xlu0 %959
    %v961 = vsel %vm105, %v957, 0.0
    %962 = vadd.xlane.f32.xlu0 %v961
    %v963 = vpop.xlane.xlu0 %962
    %v964 = vmul.f32 %v960, %v143
    %v965 = vmul.f32 %v963, %v143
    %v966 = vadd.f32 %v964, 1e-05
    %v967 = vadd.f32 %v965, 1e-05
    %v968 = vrsqrt.pop %v966
    %v969 = vmul.f32 %v968, %v966
    %v970 = vmul.f32 %v969, %v968
    %v971 = vmul.f32 0.5, %v970
    %v972 = vsub.f32 1.5, %v971
    %v973 = vmul.f32 %v968, %v972
    %vm974 = vweird.f32 %v966
    %vm975 = vweird.f32 %v968
    %vm976 = vmor %vm974, %vm975
    %v977 = vsel %vm976, %v968, %v973
    %v978 = vrsqrt.pop %v967
    %v979 = vmul.f32 %v978, %v967
    %v980 = vmul.f32 %v979, %v978
    %v981 = vmul.f32 0.5, %v980
    %v982 = vsub.f32 1.5, %v981
    %v983 = vmul.f32 %v978, %v982
    %vm984 = vweird.f32 %v967
    %vm985 = vweird.f32 %v978
    %vm986 = vmor %vm984, %vm985
    %v987 = vsel %vm986, %v978, %v983
    %v988 = vmul.f32 %v954, %v977
    %v989 = vmul.f32 %v955, %v987
    %v990 = vperm.slane %v129, 6
    %v991 = vmul.f32 %v988, %v990
    %v992 = vmul.f32 %v989, %v990
    %v993 = vperm.slane %v129, 7
    %v994 = vadd.f32 %v991, %v993
    %v995 = vadd.f32 %v992, %v993
    %v996 = vpack.c.bf16 %v995, %v994
    %v997 = vld [vmem:[%s5] sm:$0xf]
    %v998 = vld [vmem:[%s5 + $0x4] sm:$0xf]
    %v999 = vld [vmem:[%s5 + $0x8] sm:$0xf]
    %v1000 = vld [vmem:[%s5 + $0xc] sm:$0xf]
    %v1001 = vperm.slane %v130, 0
    %v1006 = vunpack.c.l.b16 %v997
    %v1007 = vunpack.c.l.b16 %v998
    %v1008 = vunpack.c.l.b16 %v999
    %v1009 = vunpack.c.l.b16 %v1000
    %v1010 = vpack.c.b16 %v1007, %v1006
    %v1011 = vpack.c.b16 %v1009, %v1008
    %v1015 = vsel %vm105, %v996, 0
    %1017 = vmatpush.bf16.msra.mxu0 0
    %1018 = vmatpush.bf16.msra.mxu0 0
    %1019 = vmatpush.bf16.msra.mxu0 0
    %1020 = vmatpush.bf16.msra.mxu0 0
    %1021 = vmatpush.bf16.msra.mxu0 0
    %1022 = vmatpush.bf16.msra.mxu0 0
    %1023 = vmatpush.bf16.msra.mxu0 %v1011
    %1024 = vmatpush.bf16.msra.mxu0 %v1010
    %1025 = vmatmul.bf16.gmra.mxu0 %v1015
    %v1026 = vpop.f32.mrf.mxu0
    %v1027 = vadd.f32 %v1001, %v1026
    %v1028 = vpop.f32.mrf.mxu0
    %v1029 = vadd.f32 %v1001, %v1028
    %1030 = vdwg.mxu0
    %v1031 = vmul.f32 %v1027, %v1027
    %v1032 = vmul.f32 %v1029, %v1029
    %v1033 = vmul.f32 %v1027, %v1031
    %v1034 = vmul.f32 %v1029, %v1032
    %v1035 = vmul.f32 %v1033, 0.044715
    %v1036 = vmul.f32 %v1034, 0.044715
    %v1037 = vadd.f32 %v1027, %v1035
    %v1038 = vadd.f32 %v1029, %v1036
    %v1039 = vmul.f32 %v1037, 0.7978846
    %v1040 = vmul.f32 %v1038, 0.7978846
    %v1041 = vtanh.pop %v1039
    %v1042 = vtanh.pop %v1040
    %v1043 = vadd.f32 %v1041, 1.0
    %v1044 = vadd.f32 %v1042, 1.0
    %v1045 = vmul.f32 %v1043, 0.5
    %v1046 = vmul.f32 %v1044, 0.5
    %v1047 = vmul.f32 %v1027, %v1045
    %v1048 = vmul.f32 %v1029, %v1046
    %v1049 = vpack.c.bf16 %v1048, %v1047
    %v1050 = vld [vmem:[%s6] sm:$0xf]
    %v1051 = vld [vmem:[%s6 + $0x4] sm:$0xf]
    %v1052 = vld [vmem:[%s6 + $0x8] sm:$0xf]
    %v1053 = vld [vmem:[%s6 + $0xc] sm:$0xf]
    %v1054 = vld [vmem:[%s6 + $0x10] sm:$0xf]
    %v1055 = vld [vmem:[%s6 + $0x14] sm:$0xf]
    %v1056 = vld [vmem:[%s6 + $0x18] sm:$0xf]
    %v1057 = vld [vmem:[%s6 + $0x1c] sm:$0xf]
    %v1058 = vld [vmem:[%s6 + $0x20] sm:$0xf]
    %v1059 = vld [vmem:[%s6 + $0x24] sm:$0xf]
    %v1060 = vld [vmem:[%s6 + $0x28] sm:$0xf]
    %v1061 = vld [vmem:[%s6 + $0x2c] sm:$0xf]
    %v1062 = vld [vmem:[%s6 + $0x30] sm:$0xf]
    %v1063 = vld [vmem:[%s6 + $0x34] sm:$0xf]
    %v1064 = vld [vmem:[%s6 + $0x38] sm:$0xf]
    %v1065 = vld [vmem:[%s6 + $0x3c] sm:$0xf]
    %v1066 = vperm.slane %v130, 1
    %v1083 = vunpack.c.l.b16 %v1050
    %v1084 = vunpack.c.l.b16 %v1051
    %v1085 = vunpack.c.l.b16 %v1052
    %v1086 = vunpack.c.l.b16 %v1053
    %v1087 = vunpack.c.l.b16 %v1054
    %v1088 = vunpack.c.l.b16 %v1055
    %v1089 = vunpack.c.l.b16 %v1056
    %v1090 = vunpack.c.l.b16 %v1057
    %v1091 = vunpack.c.l.b16 %v1058
    %v1092 = vunpack.c.l.b16 %v1059
    %v1093 = vunpack.c.l.b16 %v1060
    %v1094 = vunpack.c.l.b16 %v1061
    %v1095 = vunpack.c.l.b16 %v1062
    %v1096 = vunpack.c.l.b16 %v1063
    %v1097 = vunpack.c.l.b16 %v1064
    %v1098 = vunpack.c.l.b16 %v1065
    %v1099 = vpack.c.b16 %v1084, %v1083
    %v1100 = vpack.c.b16 %v1086, %v1085
    %v1101 = vpack.c.b16 %v1088, %v1087
    %v1102 = vpack.c.b16 %v1090, %v1089
    %v1103 = vpack.c.b16 %v1092, %v1091
    %v1104 = vpack.c.b16 %v1094, %v1093
    %v1105 = vpack.c.b16 %v1096, %v1095
    %v1106 = vpack.c.b16 %v1098, %v1097
    %1115 = vmatpush.bf16.msra.mxu0 %v1106
    %1116 = vmatpush.bf16.msra.mxu0 %v1105
    %1117 = vmatpush.bf16.msra.mxu0 %v1104
    %1118 = vmatpush.bf16.msra.mxu0 %v1103
    %1119 = vmatpush.bf16.msra.mxu0 %v1102
    %1120 = vmatpush.bf16.msra.mxu0 %v1101
    %1121 = vmatpush.bf16.msra.mxu0 %v1100
    %1122 = vmatpush.bf16.msra.mxu0 %v1099
    %1123 = vmatmul.bf16.gmra.mxu0 %v1049
    %v1124 = vpop.f32.mrf.mxu0
    %v1125 = vadd.f32 %v1066, %v1124
    %v1126 = vpop.f32.mrf.mxu0
    %v1127 = vadd.f32 %v1066, %v1126
    %1128 = vdwg.mxu0
    %v1129 = vadd.f32 %v944, %v1125
    %v1130 = vadd.f32 %v945, %v1127
    %s1131 = scalar_lea.vmem %s7, 16
    %v1132 = vld [vmem:[%s1131] sm:$0xff]
    %v1133 = vld [vmem:[%s1131 + $0x8] sm:$0x3]
    %v1134 = vsel %vm105, %v1129, 0.0
    %1135 = vadd.xlane.f32.xlu0 %v1134
    %v1136 = vpop.xlane.xlu0 %1135
    %v1137 = vsel %vm105, %v1130, 0.0
    %1138 = vadd.xlane.f32.xlu0 %v1137
    %v1139 = vpop.xlane.xlu0 %1138
    %v1140 = vmul.f32 %v1136, %v143
    %v1141 = vmul.f32 %v1139, %v143
    %v1142 = vsub.f32 %v1129, %v1140
    %v1143 = vsub.f32 %v1130, %v1141
    %v1144 = vmul.f32 %v1142, %v1142
    %v1145 = vmul.f32 %v1143, %v1143
    %v1146 = vsel %vm105, %v1144, 0.0
    %1147 = vadd.xlane.f32.xlu0 %v1146
    %v1148 = vpop.xlane.xlu0 %1147
    %v1149 = vsel %vm105, %v1145, 0.0
    %1150 = vadd.xlane.f32.xlu0 %v1149
    %v1151 = vpop.xlane.xlu0 %1150
    %v1152 = vmul.f32 %v1148, %v143
    %v1153 = vmul.f32 %v1151, %v143
    %v1154 = vadd.f32 %v1152, 1e-05
    %v1155 = vadd.f32 %v1153, 1e-05
    %v1156 = vrsqrt.pop %v1154
    %v1157 = vmul.f32 %v1156, %v1154
    %v1158 = vmul.f32 %v1157, %v1156
    %v1159 = vmul.f32 0.5, %v1158
    %v1160 = vsub.f32 1.5, %v1159
    %v1161 = vmul.f32 %v1156, %v1160
    %vm1162 = vweird.f32 %v1154
    %vm1163 = vweird.f32 %v1156
    %vm1164 = vmor %vm1162, %vm1163
    %v1165 = vsel %vm1164, %v1156, %v1161
    %v1166 = vrsqrt.pop %v1155
    %v1167 = vmul.f32 %v1166, %v1155
    %v1168 = vmul.f32 %v1167, %v1166
    %v1169 = vmul.f32 0.5, %v1168
    %v1170 = vsub.f32 1.5, %v1169
    %v1171 = vmul.f32 %v1166, %v1170
    %vm1172 = vweird.f32 %v1155
    %vm1173 = vweird.f32 %v1166
    %vm1174 = vmor %vm1172, %vm1173
    %v1175 = vsel %vm1174, %v1166, %v1171
    %v1176 = vmul.f32 %v1142, %v1165
    %v1177 = vmul.f32 %v1143, %v1175
    %v1178 = vperm.slane %v1132, 0
    %v1179 = vmul.f32 %v1176, %v1178
    %v1180 = vmul.f32 %v1177, %v1178
    %v1181 = vperm.slane %v1132, 1
    %v1182 = vadd.f32 %v1179, %v1181
    %v1183 = vadd.f32 %v1180, %v1181
    %v1184 = vpack.c.bf16 %v1183, %v1182
    %s1185 = scalar_lea.vmem %s3, 48
    %v1186 = vld [vmem:[%s1185] sm:$0xf]
    %v1187 = vld [vmem:[%s1185 + $0x4] sm:$0xf]
    %v1188 = vld [vmem:[%s1185 + $0x8] sm:$0xf]
    %v1189 = vld [vmem:[%s1185 + $0xc] sm:$0xf]
    %v1190 = vperm.slane %v1132, 2
    %v1195 = vunpack.c.l.b16 %v1186
    %v1196 = vunpack.c.l.b16 %v1187
    %v1197 = vunpack.c.l.b16 %v1188
    %v1198 = vunpack.c.l.b16 %v1189
    %v1199 = vpack.c.b16 %v1196, %v1195
    %v1200 = vpack.c.b16 %v1198, %v1197
    %v1204 = vsel %vm105, %v1184, 0
    %1206 = vmatpush.bf16.msra.mxu0 0
    %1207 = vmatpush.bf16.msra.mxu0 0
    %1208 = vmatpush.bf16.msra.mxu0 0
    %1209 = vmatpush.bf16.msra.mxu0 0
    %1210 = vmatpush.bf16.msra.mxu0 0
    %1211 = vmatpush.bf16.msra.mxu0 0
    %1212 = vmatpush.bf16.msra.mxu0 %v1200
    %1213 = vmatpush.bf16.msra.mxu0 %v1199
    %1214 = vmatmul.bf16.gmra.mxu0 %v1204
    %v1215 = vpop.f32.mrf.mxu0
    %v1216 = vadd.f32 %v1190, %v1215
    %v1217 = vpop.f32.mrf.mxu0
    %v1218 = vadd.f32 %v1190, %v1217
    %1219 = vdwg.mxu0
    %s1220 = scalar_lea.vmem %s3, 64
    %v1221 = vld [vmem:[%s1220] sm:$0xf]
    %v1222 = vld [vmem:[%s1220 + $0x4] sm:$0xf]
    %v1223 = vld [vmem:[%s1220 + $0x8] sm:$0xf]
    %v1224 = vld [vmem:[%s1220 + $0xc] sm:$0xf]
    %v1225 = vperm.slane %v1132, 3
    %v1230 = vunpack.c.l.b16 %v1221
    %v1231 = vunpack.c.l.b16 %v1222
    %v1232 = vunpack.c.l.b16 %v1223
    %v1233 = vunpack.c.l.b16 %v1224
    %v1234 = vpack.c.b16 %v1231, %v1230
    %v1235 = vpack.c.b16 %v1233, %v1232
    %1238 = vmatpush.bf16.msra.mxu0 0
    %1239 = vmatpush.bf16.msra.mxu0 0
    %1240 = vmatpush.bf16.msra.mxu0 0
    %1241 = vmatpush.bf16.msra.mxu0 0
    %1242 = vmatpush.bf16.msra.mxu0 0
    %1243 = vmatpush.bf16.msra.mxu0 0
    %1244 = vmatpush.bf16.msra.mxu0 %v1235
    %1245 = vmatpush.bf16.msra.mxu0 %v1234
    %1246 = vmatmul.bf16.gmra.mxu0 %v1204
    %v1247 = vpop.f32.mrf.mxu0
    %v1248 = vadd.f32 %v1225, %v1247
    %v1249 = vpop.f32.mrf.mxu0
    %v1250 = vadd.f32 %v1225, %v1249
    %1251 = vdwg.mxu0
    %s1252 = scalar_lea.vmem %s3, 80
    %v1253 = vld [vmem:[%s1252] sm:$0xf]
    %v1254 = vld [vmem:[%s1252 + $0x4] sm:$0xf]
    %v1255 = vld [vmem:[%s1252 + $0x8] sm:$0xf]
    %v1256 = vld [vmem:[%s1252 + $0xc] sm:$0xf]
    %v1257 = vperm.slane %v1132, 4
    %v1262 = vunpack.c.l.b16 %v1253
    %v1263 = vunpack.c.l.b16 %v1254
    %v1264 = vunpack.c.l.b16 %v1255
    %v1265 = vunpack.c.l.b16 %v1256
    %v1266 = vpack.c.b16 %v1263, %v1262
    %v1267 = vpack.c.b16 %v1265, %v1264
    %1270 = vmatpush.bf16.msra.mxu0 0
    %1271 = vmatpush.bf16.msra.mxu0 0
    %1272 = vmatpush.bf16.msra.mxu0 0
    %1273 = vmatpush.bf16.msra.mxu0 0
    %1274 = vmatpush.bf16.msra.mxu0 0
    %1275 = vmatpush.bf16.msra.mxu0 0
    %1276 = vmatpush.bf16.msra.mxu0 %v1267
    %1277 = vmatpush.bf16.msra.mxu0 %v1266
    %1278 = vmatmul.bf16.gmra.mxu0 %v1204
    %v1279 = vpop.f32.mrf.mxu0
    %v1280 = vadd.f32 %v1257, %v1279
    %v1281 = vpop.f32.mrf.mxu0
    %v1282 = vadd.f32 %v1257, %v1281
    %1283 = vdwg.mxu0
    %1286 = vrot.lane.b32.xlu0 %v1216, 120
    %v1287 = vpop.permute.xlu0 %1286
    %1288 = vrot.lane.b32.xlu0 %v1218, 120
    %v1289 = vpop.permute.xlu0 %1288
    %1292 = vrot.lane.b32.xlu0 %v1216, 112
    %v1293 = vpop.permute.xlu0 %1292
    %1294 = vrot.lane.b32.xlu0 %v1218, 112
    %v1295 = vpop.permute.xlu0 %1294
    %1298 = vrot.lane.b32.xlu0 %v1216, 104
    %v1299 = vpop.permute.xlu0 %1298
    %1300 = vrot.lane.b32.xlu0 %v1218, 104
    %v1301 = vpop.permute.xlu0 %1300
    %v1304 = vpack.c.bf16 %v1216, %v1216
    %v1305 = vpack.c.bf16 %v1218, %v1218
    %v1306 = vpack.c.bf16 %v1287, %v1287
    %v1307 = vpack.c.bf16 %v1289, %v1289
    %v1308 = vpack.c.bf16 %v1293, %v1293
    %v1309 = vpack.c.bf16 %v1295, %v1295
    %v1310 = vpack.c.bf16 %v1299, %v1299
    %v1311 = vpack.c.bf16 %v1301, %v1301
    %1314 = vrot.lane.b32.xlu0 %v1248, 120
    %v1315 = vpop.permute.xlu0 %1314
    %1316 = vrot.lane.b32.xlu0 %v1250, 120
    %v1317 = vpop.permute.xlu0 %1316
    %1320 = vrot.lane.b32.xlu0 %v1248, 112
    %v1321 = vpop.permute.xlu0 %1320
    %1322 = vrot.lane.b32.xlu0 %v1250, 112
    %v1323 = vpop.permute.xlu0 %1322
    %1326 = vrot.lane.b32.xlu0 %v1248, 104
    %v1327 = vpop.permute.xlu0 %1326
    %1328 = vrot.lane.b32.xlu0 %v1250, 104
    %v1329 = vpop.permute.xlu0 %1328
    %v1332 = vpack.c.bf16 %v1248, %v1248
    %v1333 = vpack.c.bf16 %v1250, %v1250
    %v1334 = vpack.c.bf16 %v1315, %v1315
    %v1335 = vpack.c.bf16 %v1317, %v1317
    %v1336 = vpack.c.bf16 %v1321, %v1321
    %v1337 = vpack.c.bf16 %v1323, %v1323
    %v1338 = vpack.c.bf16 %v1327, %v1327
    %v1339 = vpack.c.bf16 %v1329, %v1329
    %1342 = vrot.lane.b32.xlu0 %v1280, 120
    %v1343 = vpop.permute.xlu0 %1342
    %1344 = vrot.lane.b32.xlu0 %v1282, 120
    %v1345 = vpop.permute.xlu0 %1344
    %1348 = vrot.lane.b32.xlu0 %v1280, 112
    %v1349 = vpop.permute.xlu0 %1348
    %1350 = vrot.lane.b32.xlu0 %v1282, 112
    %v1351 = vpop.permute.xlu0 %1350
    %1354 = vrot.lane.b32.xlu0 %v1280, 104
    %v1355 = vpop.permute.xlu0 %1354
    %1356 = vrot.lane.b32.xlu0 %v1282, 104
    %v1357 = vpop.permute.xlu0 %1356
    %v1360 = vpack.c.bf16 %v1280, %v1280
    %v1361 = vpack.c.bf16 %v1282, %v1282
    %v1362 = vpack.c.bf16 %v1343, %v1343
    %v1363 = vpack.c.bf16 %v1345, %v1345
    %v1364 = vpack.c.bf16 %v1349, %v1349
    %v1365 = vpack.c.bf16 %v1351, %v1351
    %v1366 = vpack.c.bf16 %v1355, %v1355
    %v1367 = vpack.c.bf16 %v1357, %v1357
    %v1369 = vsel %vm371, %v1304, 0
    %v1372 = vsel %vm371, %v1332, 0
    %1374 = vmatpush.bf16.xpose.msra.mxu0 0
    %1375 = vmatpush.bf16.xpose.msra.mxu0 0
    %1376 = vmatpush.bf16.xpose.msra.mxu0 0
    %1377 = vmatpush.bf16.xpose.msra.mxu0 0
    %1378 = vmatpush.bf16.xpose.msra.mxu0 0
    %1379 = vmatpush.bf16.xpose.msra.mxu0 0
    %1380 = vmatpush.bf16.xpose.msra.mxu0 0
    %1381 = vmatpush.bf16.xpose.msra.mxu0 %v1372
    %1382 = vmatmul.bf16.gmra.mxu0 %v1369
    %v1383 = vpop.f32.mrf.mxu0
    %v1384 = vadd.f32 %v128, %v1383
    %v1385 = vpop.f32.mrf.mxu0
    %1386 = vdwg.mxu0
    %v1388 = vsel %vm371, %v1305, 0
    %v1391 = vsel %vm371, %v1333, 0
    %1393 = vmatpush.bf16.xpose.msra.mxu0 0
    %1394 = vmatpush.bf16.xpose.msra.mxu0 0
    %1395 = vmatpush.bf16.xpose.msra.mxu0 0
    %1396 = vmatpush.bf16.xpose.msra.mxu0 0
    %1397 = vmatpush.bf16.xpose.msra.mxu0 0
    %1398 = vmatpush.bf16.xpose.msra.mxu0 0
    %1399 = vmatpush.bf16.xpose.msra.mxu0 0
    %1400 = vmatpush.bf16.xpose.msra.mxu0 %v1391
    %1401 = vmatmul.bf16.gmra.mxu0 %v1388
    %v1402 = vpop.f32.mrf.mxu0
    %v1403 = vadd.f32 %v128, %v1402
    %v1404 = vpop.f32.mrf.mxu0
    %1405 = vdwg.mxu0
    %v1407 = vsel %vm371, %v1306, 0
    %v1410 = vsel %vm371, %v1334, 0
    %1412 = vmatpush.bf16.xpose.msra.mxu0 0
    %1413 = vmatpush.bf16.xpose.msra.mxu0 0
    %1414 = vmatpush.bf16.xpose.msra.mxu0 0
    %1415 = vmatpush.bf16.xpose.msra.mxu0 0
    %1416 = vmatpush.bf16.xpose.msra.mxu0 0
    %1417 = vmatpush.bf16.xpose.msra.mxu0 0
    %1418 = vmatpush.bf16.xpose.msra.mxu0 0
    %1419 = vmatpush.bf16.xpose.msra.mxu0 %v1410
    %1420 = vmatmul.bf16.gmra.mxu0 %v1407
    %v1421 = vpop.f32.mrf.mxu0
    %v1422 = vadd.f32 %v128, %v1421
    %v1423 = vpop.f32.mrf.mxu0
    %1424 = vdwg.mxu0
    %v1426 = vsel %vm371, %v1307, 0
    %v1429 = vsel %vm371, %v1335, 0
    %1431 = vmatpush.bf16.xpose.msra.mxu0 0
    %1432 = vmatpush.bf16.xpose.msra.mxu0 0
    %1433 = vmatpush.bf16.xpose.msra.mxu0 0
    %1434 = vmatpush.bf16.xpose.msra.mxu0 0
    %1435 = vmatpush.bf16.xpose.msra.mxu0 0
    %1436 = vmatpush.bf16.xpose.msra.mxu0 0
    %1437 = vmatpush.bf16.xpose.msra.mxu0 0
    %1438 = vmatpush.bf16.xpose.msra.mxu0 %v1429
    %1439 = vmatmul.bf16.gmra.mxu0 %v1426
    %v1440 = vpop.f32.mrf.mxu0
    %v1441 = vadd.f32 %v128, %v1440
    %v1442 = vpop.f32.mrf.mxu0
    %1443 = vdwg.mxu0
    %v1445 = vsel %vm371, %v1308, 0
    %v1448 = vsel %vm371, %v1336, 0
    %1450 = vmatpush.bf16.xpose.msra.mxu0 0
    %1451 = vmatpush.bf16.xpose.msra.mxu0 0
    %1452 = vmatpush.bf16.xpose.msra.mxu0 0
    %1453 = vmatpush.bf16.xpose.msra.mxu0 0
    %1454 = vmatpush.bf16.xpose.msra.mxu0 0
    %1455 = vmatpush.bf16.xpose.msra.mxu0 0
    %1456 = vmatpush.bf16.xpose.msra.mxu0 0
    %1457 = vmatpush.bf16.xpose.msra.mxu0 %v1448
    %1458 = vmatmul.bf16.gmra.mxu0 %v1445
    %v1459 = vpop.f32.mrf.mxu0
    %v1460 = vadd.f32 %v128, %v1459
    %v1461 = vpop.f32.mrf.mxu0
    %1462 = vdwg.mxu0
    %v1464 = vsel %vm371, %v1309, 0
    %v1467 = vsel %vm371, %v1337, 0
    %1469 = vmatpush.bf16.xpose.msra.mxu0 0
    %1470 = vmatpush.bf16.xpose.msra.mxu0 0
    %1471 = vmatpush.bf16.xpose.msra.mxu0 0
    %1472 = vmatpush.bf16.xpose.msra.mxu0 0
    %1473 = vmatpush.bf16.xpose.msra.mxu0 0
    %1474 = vmatpush.bf16.xpose.msra.mxu0 0
    %1475 = vmatpush.bf16.xpose.msra.mxu0 0
    %1476 = vmatpush.bf16.xpose.msra.mxu0 %v1467
    %1477 = vmatmul.bf16.gmra.mxu0 %v1464
    %v1478 = vpop.f32.mrf.mxu0
    %v1479 = vadd.f32 %v128, %v1478
    %v1480 = vpop.f32.mrf.mxu0
    %1481 = vdwg.mxu0
    %v1483 = vsel %vm371, %v1310, 0
    %v1486 = vsel %vm371, %v1338, 0
    %1488 = vmatpush.bf16.xpose.msra.mxu0 0
    %1489 = vmatpush.bf16.xpose.msra.mxu0 0
    %1490 = vmatpush.bf16.xpose.msra.mxu0 0
    %1491 = vmatpush.bf16.xpose.msra.mxu0 0
    %1492 = vmatpush.bf16.xpose.msra.mxu0 0
    %1493 = vmatpush.bf16.xpose.msra.mxu0 0
    %1494 = vmatpush.bf16.xpose.msra.mxu0 0
    %1495 = vmatpush.bf16.xpose.msra.mxu0 %v1486
    %1496 = vmatmul.bf16.gmra.mxu0 %v1483
    %v1497 = vpop.f32.mrf.mxu0
    %v1498 = vadd.f32 %v128, %v1497
    %v1499 = vpop.f32.mrf.mxu0
    %1500 = vdwg.mxu0
    %v1502 = vsel %vm371, %v1311, 0
    %v1505 = vsel %vm371, %v1339, 0
    %1507 = vmatpush.bf16.xpose.msra.mxu0 0
    %1508 = vmatpush.bf16.xpose.msra.mxu0 0
    %1509 = vmatpush.bf16.xpose.msra.mxu0 0
    %1510 = vmatpush.bf16.xpose.msra.mxu0 0
    %1511 = vmatpush.bf16.xpose.msra.mxu0 0
    %1512 = vmatpush.bf16.xpose.msra.mxu0 0
    %1513 = vmatpush.bf16.xpose.msra.mxu0 0
    %1514 = vmatpush.bf16.xpose.msra.mxu0 %v1505
    %1515 = vmatmul.bf16.gmra.mxu0 %v1502
    %v1516 = vpop.f32.mrf.mxu0
    %v1517 = vadd.f32 %v128, %v1516
    %v1518 = vpop.f32.mrf.mxu0
    %1519 = vdwg.mxu0
    %v1520 = vsel %vm371, %v1384, -inf
    %1521 = vmax.xlane.f32.xlu0 %v1520
    %v1522 = vpop.xlane.xlu0 %1521
    %v1523 = vsel %vm371, %v1403, -inf
    %1524 = vmax.xlane.f32.xlu0 %v1523
    %v1525 = vpop.xlane.xlu0 %1524
    %v1526 = vsel %vm371, %v1422, -inf
    %1527 = vmax.xlane.f32.xlu0 %v1526
    %v1528 = vpop.xlane.xlu0 %1527
    %v1529 = vsel %vm371, %v1441, -inf
    %1530 = vmax.xlane.f32.xlu0 %v1529
    %v1531 = vpop.xlane.xlu0 %1530
    %v1532 = vsel %vm371, %v1460, -inf
    %1533 = vmax.xlane.f32.xlu0 %v1532
    %v1534 = vpop.xlane.xlu0 %1533
    %v1535 = vsel %vm371, %v1479, -inf
    %1536 = vmax.xlane.f32.xlu0 %v1535
    %v1537 = vpop.xlane.xlu0 %1536
    %v1538 = vsel %vm371, %v1498, -inf
    %1539 = vmax.xlane.f32.xlu0 %v1538
    %v1540 = vpop.xlane.xlu0 %1539
    %v1541 = vsel %vm371, %v1517, -inf
    %1542 = vmax.xlane.f32.xlu0 %v1541
    %v1543 = vpop.xlane.xlu0 %1542
    %v1544 = vsub.f32 %v1384, %v1522
    %v1545 = vsub.f32 %v1403, %v1525
    %v1546 = vsub.f32 %v1422, %v1528
    %v1547 = vsub.f32 %v1441, %v1531
    %v1548 = vsub.f32 %v1460, %v1534
    %v1549 = vsub.f32 %v1479, %v1537
    %v1550 = vsub.f32 %v1498, %v1540
    %v1551 = vsub.f32 %v1517, %v1543
    %v1552 = vmul.f32 %v1544, 1.442695
    %v1553 = vpow.pop %v1552
    %v1554 = vmul.f32 %v1545, 1.442695
    %v1555 = vpow.pop %v1554
    %v1556 = vmul.f32 %v1546, 1.442695
    %v1557 = vpow.pop %v1556
    %v1558 = vmul.f32 %v1547, 1.442695
    %v1559 = vpow.pop %v1558
    %v1560 = vmul.f32 %v1548, 1.442695
    %v1561 = vpow.pop %v1560
    %v1562 = vmul.f32 %v1549, 1.442695
    %v1563 = vpow.pop %v1562
    %v1564 = vmul.f32 %v1550, 1.442695
    %v1565 = vpow.pop %v1564
    %v1566 = vmul.f32 %v1551, 1.442695
    %v1567 = vpow.pop %v1566
    %v1568 = vsel %vm371, %v1553, 0.0
    %1569 = vadd.xlane.f32.xlu0 %v1568
    %v1570 = vpop.xlane.xlu0 %1569
    %v1571 = vsel %vm371, %v1555, 0.0
    %1572 = vadd.xlane.f32.xlu0 %v1571
    %v1573 = vpop.xlane.xlu0 %1572
    %v1574 = vsel %vm371, %v1557, 0.0
    %1575 = vadd.xlane.f32.xlu0 %v1574
    %v1576 = vpop.xlane.xlu0 %1575
    %v1577 = vsel %vm371, %v1559, 0.0
    %1578 = vadd.xlane.f32.xlu0 %v1577
    %v1579 = vpop.xlane.xlu0 %1578
    %v1580 = vsel %vm371, %v1561, 0.0
    %1581 = vadd.xlane.f32.xlu0 %v1580
    %v1582 = vpop.xlane.xlu0 %1581
    %v1583 = vsel %vm371, %v1563, 0.0
    %1584 = vadd.xlane.f32.xlu0 %v1583
    %v1585 = vpop.xlane.xlu0 %1584
    %v1586 = vsel %vm371, %v1565, 0.0
    %1587 = vadd.xlane.f32.xlu0 %v1586
    %v1588 = vpop.xlane.xlu0 %1587
    %v1589 = vsel %vm371, %v1567, 0.0
    %1590 = vadd.xlane.f32.xlu0 %v1589
    %v1591 = vpop.xlane.xlu0 %1590
    %v1592 = vrcp.pop %v1570
    %v1593 = vmul.f32 %v1570, %v1592
    %v1594 = vsub.f32 1.0, %v1593
    %v1595 = vmul.f32 %v1592, %v1594
    %v1596 = vadd.f32 %v1592, %v1595
    %vm1597 = vweird.f32 %v1570
    %vm1598 = vweird.f32 %v1592
    %vm1599 = vmor %vm1597, %vm1598
    %v1600 = vsel %vm1599, %v1592, %v1596
    %v1601 = vand.u32 2147483647, %v1570
    %vm1602 = vcmp.eq.f32.partialorder %v1601, 8.507059e+37
    %v1603 = vand.u32 %v1570, 2147483648
    %v1604 = vor.u32 1.1754944e-38, %v1603
    %v1605 = vsel %vm1602, %v1604, %v1600
    %v1606 = vmul.f32 %v1553, %v1605
    %v1607 = vrcp.pop %v1573
    %v1608 = vmul.f32 %v1573, %v1607
    %v1609 = vsub.f32 1.0, %v1608
    %v1610 = vmul.f32 %v1607, %v1609
    %v1611 = vadd.f32 %v1607, %v1610
    %vm1612 = vweird.f32 %v1573
    %vm1613 = vweird.f32 %v1607
    %vm1614 = vmor %vm1612, %vm1613
    %v1615 = vsel %vm1614, %v1607, %v1611
    %v1616 = vand.u32 2147483647, %v1573
    %vm1617 = vcmp.eq.f32.partialorder %v1616, 8.507059e+37
    %v1618 = vand.u32 %v1573, 2147483648
    %v1619 = vor.u32 1.1754944e-38, %v1618
    %v1620 = vsel %vm1617, %v1619, %v1615
    %v1621 = vmul.f32 %v1555, %v1620
    %v1622 = vrcp.pop %v1576
    %v1623 = vmul.f32 %v1576, %v1622
    %v1624 = vsub.f32 1.0, %v1623
    %v1625 = vmul.f32 %v1622, %v1624
    %v1626 = vadd.f32 %v1622, %v1625
    %vm1627 = vweird.f32 %v1576
    %vm1628 = vweird.f32 %v1622
    %vm1629 = vmor %vm1627, %vm1628
    %v1630 = vsel %vm1629, %v1622, %v1626
    %v1631 = vand.u32 2147483647, %v1576
    %vm1632 = vcmp.eq.f32.partialorder %v1631, 8.507059e+37
    %v1633 = vand.u32 %v1576, 2147483648
    %v1634 = vor.u32 1.1754944e-38, %v1633
    %v1635 = vsel %vm1632, %v1634, %v1630
    %v1636 = vmul.f32 %v1557, %v1635
    %v1637 = vrcp.pop %v1579
    %v1638 = vmul.f32 %v1579, %v1637
    %v1639 = vsub.f32 1.0, %v1638
    %v1640 = vmul.f32 %v1637, %v1639
    %v1641 = vadd.f32 %v1637, %v1640
    %vm1642 = vweird.f32 %v1579
    %vm1643 = vweird.f32 %v1637
    %vm1644 = vmor %vm1642, %vm1643
    %v1645 = vsel %vm1644, %v1637, %v1641
    %v1646 = vand.u32 2147483647, %v1579
    %vm1647 = vcmp.eq.f32.partialorder %v1646, 8.507059e+37
    %v1648 = vand.u32 %v1579, 2147483648
    %v1649 = vor.u32 1.1754944e-38, %v1648
    %v1650 = vsel %vm1647, %v1649, %v1645
    %v1651 = vmul.f32 %v1559, %v1650
    %v1652 = vrcp.pop %v1582
    %v1653 = vmul.f32 %v1582, %v1652
    %v1654 = vsub.f32 1.0, %v1653
    %v1655 = vmul.f32 %v1652, %v1654
    %v1656 = vadd.f32 %v1652, %v1655
    %vm1657 = vweird.f32 %v1582
    %vm1658 = vweird.f32 %v1652
    %vm1659 = vmor %vm1657, %vm1658
    %v1660 = vsel %vm1659, %v1652, %v1656
    %v1661 = vand.u32 2147483647, %v1582
    %vm1662 = vcmp.eq.f32.partialorder %v1661, 8.507059e+37
    %v1663 = vand.u32 %v1582, 2147483648
    %v1664 = vor.u32 1.1754944e-38, %v1663
    %v1665 = vsel %vm1662, %v1664, %v1660
    %v1666 = vmul.f32 %v1561, %v1665
    %v1667 = vrcp.pop %v1585
    %v1668 = vmul.f32 %v1585, %v1667
    %v1669 = vsub.f32 1.0, %v1668
    %v1670 = vmul.f32 %v1667, %v1669
    %v1671 = vadd.f32 %v1667, %v1670
    %vm1672 = vweird.f32 %v1585
    %vm1673 = vweird.f32 %v1667
    %vm1674 = vmor %vm1672, %vm1673
    %v1675 = vsel %vm1674, %v1667, %v1671
    %v1676 = vand.u32 2147483647, %v1585
    %vm1677 = vcmp.eq.f32.partialorder %v1676, 8.507059e+37
    %v1678 = vand.u32 %v1585, 2147483648
    %v1679 = vor.u32 1.1754944e-38, %v1678
    %v1680 = vsel %vm1677, %v1679, %v1675
    %v1681 = vmul.f32 %v1563, %v1680
    %v1682 = vrcp.pop %v1588
    %v1683 = vmul.f32 %v1588, %v1682
    %v1684 = vsub.f32 1.0, %v1683
    %v1685 = vmul.f32 %v1682, %v1684
    %v1686 = vadd.f32 %v1682, %v1685
    %vm1687 = vweird.f32 %v1588
    %vm1688 = vweird.f32 %v1682
    %vm1689 = vmor %vm1687, %vm1688
    %v1690 = vsel %vm1689, %v1682, %v1686
    %v1691 = vand.u32 2147483647, %v1588
    %vm1692 = vcmp.eq.f32.partialorder %v1691, 8.507059e+37
    %v1693 = vand.u32 %v1588, 2147483648
    %v1694 = vor.u32 1.1754944e-38, %v1693
    %v1695 = vsel %vm1692, %v1694, %v1690
    %v1696 = vmul.f32 %v1565, %v1695
    %v1697 = vrcp.pop %v1591
    %v1698 = vmul.f32 %v1591, %v1697
    %v1699 = vsub.f32 1.0, %v1698
    %v1700 = vmul.f32 %v1697, %v1699
    %v1701 = vadd.f32 %v1697, %v1700
    %vm1702 = vweird.f32 %v1591
    %vm1703 = vweird.f32 %v1697
    %vm1704 = vmor %vm1702, %vm1703
    %v1705 = vsel %vm1704, %v1697, %v1701
    %v1706 = vand.u32 2147483647, %v1591
    %vm1707 = vcmp.eq.f32.partialorder %v1706, 8.507059e+37
    %v1708 = vand.u32 %v1591, 2147483648
    %v1709 = vor.u32 1.1754944e-38, %v1708
    %v1710 = vsel %vm1707, %v1709, %v1705
    %v1711 = vmul.f32 %v1567, %v1710
    %v1712 = vpack.c.bf16 %v1606, %v1606
    %v1713 = vpack.c.bf16 %v1621, %v1621
    %v1714 = vpack.c.bf16 %v1636, %v1636
    %v1715 = vpack.c.bf16 %v1651, %v1651
    %v1716 = vpack.c.bf16 %v1666, %v1666
    %v1717 = vpack.c.bf16 %v1681, %v1681
    %v1718 = vpack.c.bf16 %v1696, %v1696
    %v1719 = vpack.c.bf16 %v1711, %v1711
    %v1721 = vsel %vm371, %v1712, 0
    %v1724 = vsel %vm727, %v1360, 0
    %1726 = vmatpush.bf16.msra.mxu0 0
    %1727 = vmatpush.bf16.msra.mxu0 0
    %1728 = vmatpush.bf16.msra.mxu0 0
    %1729 = vmatpush.bf16.msra.mxu0 0
    %1730 = vmatpush.bf16.msra.mxu0 0
    %1731 = vmatpush.bf16.msra.mxu0 0
    %1732 = vmatpush.bf16.msra.mxu0 0
    %1733 = vmatpush.bf16.msra.mxu0 %v1724
    %1734 = vmatmul.bf16.gmra.mxu0 %v1721
    %v1735 = vpop.f32.mrf.mxu0
    %v1736 = vadd.f32 0.0, %v1735
    %v1737 = vpop.f32.mrf.mxu0
    %1738 = vdwg.mxu0
    %v1740 = vsel %vm371, %v1713, 0
    %v1743 = vsel %vm727, %v1361, 0
    %1745 = vmatpush.bf16.msra.mxu0 0
    %1746 = vmatpush.bf16.msra.mxu0 0
    %1747 = vmatpush.bf16.msra.mxu0 0
    %1748 = vmatpush.bf16.msra.mxu0 0
    %1749 = vmatpush.bf16.msra.mxu0 0
    %1750 = vmatpush.bf16.msra.mxu0 0
    %1751 = vmatpush.bf16.msra.mxu0 0
    %1752 = vmatpush.bf16.msra.mxu0 %v1743
    %1753 = vmatmul.bf16.gmra.mxu0 %v1740
    %v1754 = vpop.f32.mrf.mxu0
    %v1755 = vadd.f32 0.0, %v1754
    %v1756 = vpop.f32.mrf.mxu0
    %1757 = vdwg.mxu0
    %v1759 = vsel %vm371, %v1714, 0
    %v1762 = vsel %vm727, %v1362, 0
    %1764 = vmatpush.bf16.msra.mxu0 0
    %1765 = vmatpush.bf16.msra.mxu0 0
    %1766 = vmatpush.bf16.msra.mxu0 0
    %1767 = vmatpush.bf16.msra.mxu0 0
    %1768 = vmatpush.bf16.msra.mxu0 0
    %1769 = vmatpush.bf16.msra.mxu0 0
    %1770 = vmatpush.bf16.msra.mxu0 0
    %1771 = vmatpush.bf16.msra.mxu0 %v1762
    %1772 = vmatmul.bf16.gmra.mxu0 %v1759
    %v1773 = vpop.f32.mrf.mxu0
    %v1774 = vadd.f32 0.0, %v1773
    %v1775 = vpop.f32.mrf.mxu0
    %1776 = vdwg.mxu0
    %v1778 = vsel %vm371, %v1715, 0
    %v1781 = vsel %vm727, %v1363, 0
    %1783 = vmatpush.bf16.msra.mxu0 0
    %1784 = vmatpush.bf16.msra.mxu0 0
    %1785 = vmatpush.bf16.msra.mxu0 0
    %1786 = vmatpush.bf16.msra.mxu0 0
    %1787 = vmatpush.bf16.msra.mxu0 0
    %1788 = vmatpush.bf16.msra.mxu0 0
    %1789 = vmatpush.bf16.msra.mxu0 0
    %1790 = vmatpush.bf16.msra.mxu0 %v1781
    %1791 = vmatmul.bf16.gmra.mxu0 %v1778
    %v1792 = vpop.f32.mrf.mxu0
    %v1793 = vadd.f32 0.0, %v1792
    %v1794 = vpop.f32.mrf.mxu0
    %1795 = vdwg.mxu0
    %v1797 = vsel %vm371, %v1716, 0
    %v1800 = vsel %vm727, %v1364, 0
    %1802 = vmatpush.bf16.msra.mxu0 0
    %1803 = vmatpush.bf16.msra.mxu0 0
    %1804 = vmatpush.bf16.msra.mxu0 0
    %1805 = vmatpush.bf16.msra.mxu0 0
    %1806 = vmatpush.bf16.msra.mxu0 0
    %1807 = vmatpush.bf16.msra.mxu0 0
    %1808 = vmatpush.bf16.msra.mxu0 0
    %1809 = vmatpush.bf16.msra.mxu0 %v1800
    %1810 = vmatmul.bf16.gmra.mxu0 %v1797
    %v1811 = vpop.f32.mrf.mxu0
    %v1812 = vadd.f32 0.0, %v1811
    %v1813 = vpop.f32.mrf.mxu0
    %1814 = vdwg.mxu0
    %v1816 = vsel %vm371, %v1717, 0
    %v1819 = vsel %vm727, %v1365, 0
    %1821 = vmatpush.bf16.msra.mxu0 0
    %1822 = vmatpush.bf16.msra.mxu0 0
    %1823 = vmatpush.bf16.msra.mxu0 0
    %1824 = vmatpush.bf16.msra.mxu0 0
    %1825 = vmatpush.bf16.msra.mxu0 0
    %1826 = vmatpush.bf16.msra.mxu0 0
    %1827 = vmatpush.bf16.msra.mxu0 0
    %1828 = vmatpush.bf16.msra.mxu0 %v1819
    %1829 = vmatmul.bf16.gmra.mxu0 %v1816
    %v1830 = vpop.f32.mrf.mxu0
    %v1831 = vadd.f32 0.0, %v1830
    %v1832 = vpop.f32.mrf.mxu0
    %1833 = vdwg.mxu0
    %v1835 = vsel %vm371, %v1718, 0
    %v1838 = vsel %vm727, %v1366, 0
    %1840 = vmatpush.bf16.msra.mxu0 0
    %1841 = vmatpush.bf16.msra.mxu0 0
    %1842 = vmatpush.bf16.msra.mxu0 0
    %1843 = vmatpush.bf16.msra.mxu0 0
    %1844 = vmatpush.bf16.msra.mxu0 0
    %1845 = vmatpush.bf16.msra.mxu0 0
    %1846 = vmatpush.bf16.msra.mxu0 0
    %1847 = vmatpush.bf16.msra.mxu0 %v1838
    %1848 = vmatmul.bf16.gmra.mxu0 %v1835
    %v1849 = vpop.f32.mrf.mxu0
    %v1850 = vadd.f32 0.0, %v1849
    %v1851 = vpop.f32.mrf.mxu0
    %1852 = vdwg.mxu0
    %v1854 = vsel %vm371, %v1719, 0
    %v1857 = vsel %vm727, %v1367, 0
    %1859 = vmatpush.bf16.msra.mxu0 0
    %1860 = vmatpush.bf16.msra.mxu0 0
    %1861 = vmatpush.bf16.msra.mxu0 0
    %1862 = vmatpush.bf16.msra.mxu0 0
    %1863 = vmatpush.bf16.msra.mxu0 0
    %1864 = vmatpush.bf16.msra.mxu0 0
    %1865 = vmatpush.bf16.msra.mxu0 0
    %1866 = vmatpush.bf16.msra.mxu0 %v1857
    %1867 = vmatmul.bf16.gmra.mxu0 %v1854
    %v1868 = vpop.f32.mrf.mxu0
    %v1869 = vadd.f32 0.0, %v1868
    %v1870 = vpop.f32.mrf.mxu0
    %1871 = vdwg.mxu0
    %1874 = vrot.lane.b32.xlu0 %v1774, 8
    %v1875 = vpop.permute.xlu0 %1874
    %1876 = vrot.lane.b32.xlu0 %v1793, 8
    %v1877 = vpop.permute.xlu0 %1876
    %1882 = vrot.lane.b32.xlu0 %v1812, 16
    %v1883 = vpop.permute.xlu0 %1882
    %1884 = vrot.lane.b32.xlu0 %v1831, 16
    %v1885 = vpop.permute.xlu0 %1884
    %1890 = vrot.lane.b32.xlu0 %v1850, 24
    %v1891 = vpop.permute.xlu0 %1890
    %1892 = vrot.lane.b32.xlu0 %v1869, 24
    %v1893 = vpop.permute.xlu0 %1892
    %v1896 = vsel %vm371, %v1736, %v1875
    %v1897 = vsel %vm371, %v1755, %v1877
    %v1898 = vsel %vm903, %v1896, %v1883
    %v1899 = vsel %vm903, %v1897, %v1885
    %v1900 = vsel %vm906, %v1898, %v1891
    %v1901 = vsel %vm906, %v1899, %v1893
    %v1902 = vpack.c.bf16 %v1901, %v1900
    %s1903 = scalar_lea.vmem %s4, 16
    %v1904 = vld [vmem:[%s1903] sm:$0xf]
    %v1905 = vld [vmem:[%s1903 + $0x4] sm:$0xf]
    %v1906 = vld [vmem:[%s1903 + $0x8] sm:$0xf]
    %v1907 = vld [vmem:[%s1903 + $0xc] sm:$0xf]
    %v1908 = vperm.slane %v1132, 5
    %v1913 = vunpack.c.l.b16 %v1904
    %v1914 = vunpack.c.l.b16 %v1905
    %v1915 = vunpack.c.l.b16 %v1906
    %v1916 = vunpack.c.l.b16 %v1907
    %v1917 = vpack.c.b16 %v1914, %v1913
    %v1918 = vpack.c.b16 %v1916, %v1915
    %v1922 = vsel %vm105, %v1902, 0
    %1924 = vmatpush.bf16.msra.mxu0 0
    %1925 = vmatpush.bf16.msra.mxu0 0
    %1926 = vmatpush.bf16.msra.mxu0 0
    %1927 = vmatpush.bf16.msra.mxu0 0
    %1928 = vmatpush.bf16.msra.mxu0 0
    %1929 = vmatpush.bf16.msra.mxu0 0
    %1930 = vmatpush.bf16.msra.mxu0 %v1918
    %1931 = vmatpush.bf16.msra.mxu0 %v1917
    %1932 = vmatmul.bf16.gmra.mxu0 %v1922
    %v1933 = vpop.f32.mrf.mxu0
    %v1934 = vadd.f32 %v1908, %v1933
    %v1935 = vpop.f32.mrf.mxu0
    %v1936 = vadd.f32 %v1908, %v1935
    %1937 = vdwg.mxu0
    %v1938 = vadd.f32 %v1129, %v1934
    %v1939 = vadd.f32 %v1130, %v1936
    %v1940 = vsel %vm105, %v1938, 0.0
    %1941 = vadd.xlane.f32.xlu0 %v1940
    %v1942 = vpop.xlane.xlu0 %1941
    %v1943 = vsel %vm105, %v1939, 0.0
    %1944 = vadd.xlane.f32.xlu0 %v1943
    %v1945 = vpop.xlane.xlu0 %1944
    %v1946 = vmul.f32 %v1942, %v143
    %v1947 = vmul.f32 %v1945, %v143
    %v1948 = vsub.f32 %v1938, %v1946
    %v1949 = vsub.f32 %v1939, %v1947
    %v1950 = vmul.f32 %v1948, %v1948
    %v1951 = vmul.f32 %v1949, %v1949
    %v1952 = vsel %vm105, %v1950, 0.0
    %1953 = vadd.xlane.f32.xlu0 %v1952
    %v1954 = vpop.xlane.xlu0 %1953
    %v1955 = vsel %vm105, %v1951, 0.0
    %1956 = vadd.xlane.f32.xlu0 %v1955
    %v1957 = vpop.xlane.xlu0 %1956
    %v1958 = vmul.f32 %v1954, %v143
    %v1959 = vmul.f32 %v1957, %v143
    %v1960 = vadd.f32 %v1958, 1e-05
    %v1961 = vadd.f32 %v1959, 1e-05
    %v1962 = vrsqrt.pop %v1960
    %v1963 = vmul.f32 %v1962, %v1960
    %v1964 = vmul.f32 %v1963, %v1962
    %v1965 = vmul.f32 0.5, %v1964
    %v1966 = vsub.f32 1.5, %v1965
    %v1967 = vmul.f32 %v1962, %v1966
    %vm1968 = vweird.f32 %v1960
    %vm1969 = vweird.f32 %v1962
    %vm1970 = vmor %vm1968, %vm1969
    %v1971 = vsel %vm1970, %v1962, %v1967
    %v1972 = vrsqrt.pop %v1961
    %v1973 = vmul.f32 %v1972, %v1961
    %v1974 = vmul.f32 %v1973, %v1972
    %v1975 = vmul.f32 0.5, %v1974
    %v1976 = vsub.f32 1.5, %v1975
    %v1977 = vmul.f32 %v1972, %v1976
    %vm1978 = vweird.f32 %v1961
    %vm1979 = vweird.f32 %v1972
    %vm1980 = vmor %vm1978, %vm1979
    %v1981 = vsel %vm1980, %v1972, %v1977
    %v1982 = vmul.f32 %v1948, %v1971
    %v1983 = vmul.f32 %v1949, %v1981
    %v1984 = vperm.slane %v1132, 6
    %v1985 = vmul.f32 %v1982, %v1984
    %v1986 = vmul.f32 %v1983, %v1984
    %v1987 = vperm.slane %v1132, 7
    %v1988 = vadd.f32 %v1985, %v1987
    %v1989 = vadd.f32 %v1986, %v1987
    %v1990 = vpack.c.bf16 %v1989, %v1988
    %s1991 = scalar_lea.vmem %s5, 16
    %v1992 = vld [vmem:[%s1991] sm:$0xf]
    %v1993 = vld [vmem:[%s1991 + $0x4] sm:$0xf]
    %v1994 = vld [vmem:[%s1991 + $0x8] sm:$0xf]
    %v1995 = vld [vmem:[%s1991 + $0xc] sm:$0xf]
    %v1996 = vperm.slane %v1133, 0
    %v2001 = vunpack.c.l.b16 %v1992
    %v2002 = vunpack.c.l.b16 %v1993
    %v2003 = vunpack.c.l.b16 %v1994
    %v2004 = vunpack.c.l.b16 %v1995
    %v2005 = vpack.c.b16 %v2002, %v2001
    %v2006 = vpack.c.b16 %v2004, %v2003
    %v2010 = vsel %vm105, %v1990, 0
    %2012 = vmatpush.bf16.msra.mxu0 0
    %2013 = vmatpush.bf16.msra.mxu0 0
    %2014 = vmatpush.bf16.msra.mxu0 0
    %2015 = vmatpush.bf16.msra.mxu0 0
    %2016 = vmatpush.bf16.msra.mxu0 0
    %2017 = vmatpush.bf16.msra.mxu0 0
    %2018 = vmatpush.bf16.msra.mxu0 %v2006
    %2019 = vmatpush.bf16.msra.mxu0 %v2005
    %2020 = vmatmul.bf16.gmra.mxu0 %v2010
    %v2021 = vpop.f32.mrf.mxu0
    %v2022 = vadd.f32 %v1996, %v2021
    %v2023 = vpop.f32.mrf.mxu0
    %v2024 = vadd.f32 %v1996, %v2023
    %2025 = vdwg.mxu0
    %v2026 = vmul.f32 %v2022, %v2022
    %v2027 = vmul.f32 %v2024, %v2024
    %v2028 = vmul.f32 %v2022, %v2026
    %v2029 = vmul.f32 %v2024, %v2027
    %v2030 = vmul.f32 %v2028, 0.044715
    %v2031 = vmul.f32 %v2029, 0.044715
    %v2032 = vadd.f32 %v2022, %v2030
    %v2033 = vadd.f32 %v2024, %v2031
    %v2034 = vmul.f32 %v2032, 0.7978846
    %v2035 = vmul.f32 %v2033, 0.7978846
    %v2036 = vtanh.pop %v2034
    %v2037 = vtanh.pop %v2035
    %v2038 = vadd.f32 %v2036, 1.0
    %v2039 = vadd.f32 %v2037, 1.0
    %v2040 = vmul.f32 %v2038, 0.5
    %v2041 = vmul.f32 %v2039, 0.5
    %v2042 = vmul.f32 %v2022, %v2040
    %v2043 = vmul.f32 %v2024, %v2041
    %v2044 = vpack.c.bf16 %v2043, %v2042
    %s2045 = scalar_lea.vmem %s6, 64
    %v2046 = vld [vmem:[%s2045] sm:$0xf]
    %v2047 = vld [vmem:[%s2045 + $0x4] sm:$0xf]
    %v2048 = vld [vmem:[%s2045 + $0x8] sm:$0xf]
    %v2049 = vld [vmem:[%s2045 + $0xc] sm:$0xf]
    %v2050 = vld [vmem:[%s2045 + $0x10] sm:$0xf]
    %v2051 = vld [vmem:[%s2045 + $0x14] sm:$0xf]
    %v2052 = vld [vmem:[%s2045 + $0x18] sm:$0xf]
    %v2053 = vld [vmem:[%s2045 + $0x1c] sm:$0xf]
    %v2054 = vld [vmem:[%s2045 + $0x20] sm:$0xf]
    %v2055 = vld [vmem:[%s2045 + $0x24] sm:$0xf]
    %v2056 = vld [vmem:[%s2045 + $0x28] sm:$0xf]
    %v2057 = vld [vmem:[%s2045 + $0x2c] sm:$0xf]
    %v2058 = vld [vmem:[%s2045 + $0x30] sm:$0xf]
    %v2059 = vld [vmem:[%s2045 + $0x34] sm:$0xf]
    %v2060 = vld [vmem:[%s2045 + $0x38] sm:$0xf]
    %v2061 = vld [vmem:[%s2045 + $0x3c] sm:$0xf]
    %v2062 = vperm.slane %v1133, 1
    %v2079 = vunpack.c.l.b16 %v2046
    %v2080 = vunpack.c.l.b16 %v2047
    %v2081 = vunpack.c.l.b16 %v2048
    %v2082 = vunpack.c.l.b16 %v2049
    %v2083 = vunpack.c.l.b16 %v2050
    %v2084 = vunpack.c.l.b16 %v2051
    %v2085 = vunpack.c.l.b16 %v2052
    %v2086 = vunpack.c.l.b16 %v2053
    %v2087 = vunpack.c.l.b16 %v2054
    %v2088 = vunpack.c.l.b16 %v2055
    %v2089 = vunpack.c.l.b16 %v2056
    %v2090 = vunpack.c.l.b16 %v2057
    %v2091 = vunpack.c.l.b16 %v2058
    %v2092 = vunpack.c.l.b16 %v2059
    %v2093 = vunpack.c.l.b16 %v2060
    %v2094 = vunpack.c.l.b16 %v2061
    %v2095 = vpack.c.b16 %v2080, %v2079
    %v2096 = vpack.c.b16 %v2082, %v2081
    %v2097 = vpack.c.b16 %v2084, %v2083
    %v2098 = vpack.c.b16 %v2086, %v2085
    %v2099 = vpack.c.b16 %v2088, %v2087
    %v2100 = vpack.c.b16 %v2090, %v2089
    %v2101 = vpack.c.b16 %v2092, %v2091
    %v2102 = vpack.c.b16 %v2094, %v2093
    %2111 = vmatpush.bf16.msra.mxu0 %v2102
    %2112 = vmatpush.bf16.msra.mxu0 %v2101
    %2113 = vmatpush.bf16.msra.mxu0 %v2100
    %2114 = vmatpush.bf16.msra.mxu0 %v2099
    %2115 = vmatpush.bf16.msra.mxu0 %v2098
    %2116 = vmatpush.bf16.msra.mxu0 %v2097
    %2117 = vmatpush.bf16.msra.mxu0 %v2096
    %2118 = vmatpush.bf16.msra.mxu0 %v2095
    %2119 = vmatmul.bf16.gmra.mxu0 %v2044
    %v2120 = vpop.f32.mrf.mxu0
    %v2121 = vadd.f32 %v2062, %v2120
    %v2122 = vpop.f32.mrf.mxu0
    %v2123 = vadd.f32 %v2062, %v2122
    %2124 = vdwg.mxu0
    %v2125 = vadd.f32 %v1938, %v2121
    %v2126 = vadd.f32 %v1939, %v2123
    %v2127 = vld [vmem:[%s8] sm:$0x1]
    %v2128 = vld [vmem:[%s8 + $0x1] sm:$0x1]
    %v2129 = vsel %vm105, %v2125, 0.0
    %2130 = vadd.xlane.f32.xlu0 %v2129
    %v2131 = vpop.xlane.xlu0 %2130
    %v2132 = vsel %vm105, %v2126, 0.0
    %2133 = vadd.xlane.f32.xlu0 %v2132
    %v2134 = vpop.xlane.xlu0 %2133
    %v2135 = vmul.f32 %v2131, %v143
    %v2136 = vmul.f32 %v2134, %v143
    %v2137 = vsub.f32 %v2125, %v2135
    %v2138 = vsub.f32 %v2126, %v2136
    %v2139 = vmul.f32 %v2137, %v2137
    %v2140 = vmul.f32 %v2138, %v2138
    %v2141 = vsel %vm105, %v2139, 0.0
    %2142 = vadd.xlane.f32.xlu0 %v2141
    %v2143 = vpop.xlane.xlu0 %2142
    %v2144 = vsel %vm105, %v2140, 0.0
    %2145 = vadd.xlane.f32.xlu0 %v2144
    %v2146 = vpop.xlane.xlu0 %2145
    %v2147 = vmul.f32 %v2143, %v143
    %v2148 = vmul.f32 %v2146, %v143
    %v2149 = vadd.f32 %v2147, 1e-05
    %v2150 = vadd.f32 %v2148, 1e-05
    %v2151 = vrsqrt.pop %v2149
    %v2152 = vmul.f32 %v2151, %v2149
    %v2153 = vmul.f32 %v2152, %v2151
    %v2154 = vmul.f32 0.5, %v2153
    %v2155 = vsub.f32 1.5, %v2154
    %v2156 = vmul.f32 %v2151, %v2155
    %vm2157 = vweird.f32 %v2149
    %vm2158 = vweird.f32 %v2151
    %vm2159 = vmor %vm2157, %vm2158
    %v2160 = vsel %vm2159, %v2151, %v2156
    %v2161 = vrsqrt.pop %v2150
    %v2162 = vmul.f32 %v2161, %v2150
    %v2163 = vmul.f32 %v2162, %v2161
    %v2164 = vmul.f32 0.5, %v2163
    %v2165 = vsub.f32 1.5, %v2164
    %v2166 = vmul.f32 %v2161, %v2165
    %vm2167 = vweird.f32 %v2150
    %vm2168 = vweird.f32 %v2161
    %vm2169 = vmor %vm2167, %vm2168
    %v2170 = vsel %vm2169, %v2161, %v2166
    %v2171 = vmul.f32 %v2137, %v2160
    %v2172 = vmul.f32 %v2138, %v2170
    %v2173 = vperm.slane %v2127, 0
    %v2174 = vmul.f32 %v2171, %v2173
    %v2175 = vmul.f32 %v2172, %v2173
    %v2176 = vperm.slane %v2128, 0
    %v2177 = vadd.f32 %v2174, %v2176
    %v2178 = vadd.f32 %v2175, %v2176
    %v2179 = vpack.c.bf16 %v2178, %v2177
    %v2180 = vld [vmem:[#allocation7] sm:$0xf]
    %v2181 = vld [vmem:[#allocation7 + $0x4] sm:$0xf]
    %v2182 = vld [vmem:[#allocation7 + $0x8] sm:$0xf]
    %v2183 = vld [vmem:[#allocation7 + $0xc] sm:$0xf]
    %v2184 = vld [vmem:[%s8 + $0x2] sm:$0x1]
    %v2185 = vperm.slane %v2184, 0
    %v2190 = vunpack.c.l.b16 %v2180
    %v2191 = vunpack.c.l.b16 %v2181
    %v2192 = vunpack.c.l.b16 %v2182
    %v2193 = vunpack.c.l.b16 %v2183
    %v2194 = vpack.c.b16 %v2191, %v2190
    %v2195 = vpack.c.b16 %v2193, %v2192
    %v2199 = vsel %vm105, %v2179, 0
    %2201 = vmatpush.bf16.msra.mxu0 0
    %2202 = vmatpush.bf16.msra.mxu0 0
    %2203 = vmatpush.bf16.msra.mxu0 0
    %2204 = vmatpush.bf16.msra.mxu0 0
    %2205 = vmatpush.bf16.msra.mxu0 0
    %2206 = vmatpush.bf16.msra.mxu0 0
    %2207 = vmatpush.bf16.msra.mxu0 %v2195
    %2208 = vmatpush.bf16.msra.mxu0 %v2194
    %2209 = vmatmul.bf16.gmra.mxu0 %v2199
    %v2210 = vpop.f32.mrf.mxu0
    %v2211 = vadd.f32 %v2185, %v2210
    %v2212 = vpop.f32.mrf.mxu0
    %v2213 = vadd.f32 %v2185, %v2212
    %2214 = vdwg.mxu0
    %2215 = vst [vmem:[#allocation8] sm:$0xff] %v2211
    %2216 = vst [vmem:[#allocation8 + $0x8] sm:$0xff] %v2213
    // Predicated region
    $region54: #{tpu_custom_call.1} parent=1 // pred_check
      _
    $region55: #{tpu_custom_call.1} parent=1 // pred_check_branch
      %2218 = sbr.rel (0) target = $region57
    $region56: #{tpu_custom_call.1} parent=1 // pred_region
      %2220 = vsyncadd [#allocation4], 0
      %s2221 = sshll.u32 [#allocation8], 4
      %s2222 = int_to_ptr.vmem [resolvable:$true] %s2221
      %s2223 = sshll.u32 %s10, 4
      %s2224 = int_to_ptr.hbm [resolvable:$true] %s2223
      %2229 = dma.vmem_to_hbm [thread:$0]  %s2222, 256, %s2224, [#allocation4], 128, 128, 8
    $region57: #{tpu_custom_call.1} parent=1 // pred_fallthru
      _
    // Predicated region
    $region58: #{tpu_custom_call.1} parent=1 // pred_check
      _
    $region59: #{tpu_custom_call.1} parent=1 // pred_check_branch
      %2231 = sbr.rel (0) target = $region61
    $region60: #{tpu_custom_call.1} parent=1 // pred_region
      %2233 = dma.done [#allocation4], 256
    $region61: #{tpu_custom_call.1} parent=1 // pred_fallthru
      _
    %2234 = vsyncpa [#allocation3], 1
    %2235 = vsyncpa [#allocation6], 1
    %2236 = vsyncpa [#allocation4], 1

</llo_original>
